<compile_context>
chip_gen: v7x
topology: tpu7x:2x2x1
jax: 0.10.0
libtpu: 0.0.40
codegen_flags: <defaults>
</compile_context>

<pallas_src>
import functools

import jax
import jax.numpy as jnp
from jax import lax
from jax.experimental import pallas as pl
from jax.experimental.pallas import tpu as pltpu


def _cdiv(a, b):
    return -(-a // b)


def _stl_kernel(theta_ref, src_ref, out_ref, *, H, W, C, HW, contract_x):
    # theta_ref: (N*6,) f32 in SMEM (scalar prefetch) -- flattened 2x3 affine per batch
    # src_ref  : (1, C*R, K)  -- source, rows (c, r), cols k (K = larger spatial axis)
    # out_ref  : (1, C, tp)   -- output pixels for this tile (lane-dense)
    n = pl.program_id(0)
    j = pl.program_id(1)
    tp = out_ref.shape[-1]

    K = W if contract_x else H          # MXU-contracted spatial axis (the larger one)
    R = H if contract_x else W          # streamed-reduce spatial axis

    t00 = theta_ref[6 * n + 0]
    t01 = theta_ref[6 * n + 1]
    t02 = theta_ref[6 * n + 2]
    t10 = theta_ref[6 * n + 3]
    t11 = theta_ref[6 * n + 4]
    t12 = theta_ref[6 * n + 5]

    # Flattened output-pixel indices of this tile, built in-kernel (no DMA'd base grid).
    # Padded tail pixels are clamped to the last valid pixel and sliced off outside.
    pix = j * tp + lax.broadcasted_iota(jnp.int32, (1, tp), 1)
    pix = jnp.minimum(pix, HW - 1).astype(jnp.float32)
    # y = pix // W, x = pix % W computed in f32 (exact for H*W < ~4e6, i.e. <~2048^2).
    py = jnp.floor((pix + 0.5) * (1.0 / W))
    px = pix - py * W

    # affine_grid (align_corners=True) normalized coords -> grid_sample pixel coords.
    xg = px * (2.0 / max(W - 1, 1)) - 1.0
    yg = py * (2.0 / max(H - 1, 1)) - 1.0
    gx = t00 * xg + t01 * yg + t02
    gy = t10 * xg + t11 * yg + t12
    ix = (gx + 1.0) * (0.5 * (W - 1.0))         # pixel-space x (W axis)
    iy = (gy + 1.0) * (0.5 * (H - 1.0))         # pixel-space y (H axis)

    coord_k = ix if contract_x else iy
    coord_r = iy if contract_x else ix

    def axis_sel(coord, size):
        # (size, tp) per-axis bilinear corner-selection matrix, zero-padding semantics:
        # out-of-bounds corners get zero weight (residual index aliasing is masked).
        c0 = jnp.floor(coord)
        f = coord - c0
        w0 = jnp.where((c0 >= 0.0) & (c0 <= size - 1.0), 1.0 - f, 0.0)
        w1 = jnp.where((c0 >= -1.0) & (c0 <= size - 2.0), f, 0.0)
        c0i = jnp.clip(c0, -1.0, float(size)).astype(jnp.int32)          # (1, tp)
        iota = lax.broadcasted_iota(jnp.int32, (size, tp), 0)
        return jnp.where(iota == c0i, w0, 0.0) + jnp.where(iota == c0i + 1, w1, 0.0)

    sel_k = axis_sel(coord_k, K)                                          # (K, tp)
    sel_r = axis_sel(coord_r, R)                                          # (R, tp)

    src2d = src_ref[0]                                                    # (C*R, K)
    # Column gather on the MXU: bf16 sources stay bf16 (f32 accumulate); f32 stays f32.
    # TODO(synk): for large images (H, W >~ 128) band-limit this contraction to the
    # source columns actually touched by the tile (pl.ds on the K axis) or use a DMA
    # gather; the dense K-length contraction does O(K) MACs per output pixel.
    q = jnp.dot(src2d, sel_k.astype(src2d.dtype),
                preferred_element_type=jnp.float32)                       # (C*R, tp) f32

    # Row gather + reduce, streamed one channel band at a time so the full (C, R, tp)
    # product is never materialized (keeps vreg/VMEM pressure low at large tiles).
    rows = []
    for c in range(C):
        qc = q[c * R:(c + 1) * R, :]                                      # (R, tp)
        rows.append(jnp.sum(qc * sel_r, axis=0, keepdims=True))           # (1, tp)
    out_ref[0] = jnp.concatenate(rows, axis=0).astype(out_ref.dtype)


def _pick_tile(HW, C, R, K, N, target_tp=1024, budget_bytes=10 * 2**20):
    """Largest lane-dense pixel tile that fits a conservative VMEM budget.

    Budget is kept well under v5e's 16 MiB scoped default and v7x's 32 MiB scoped /
    64 MiB physical VMEM.  per-tp terms: q (C*R), selection matrices (K + R), the
    per-channel product temp (R), double-buffered out block (2*C) + coordinate temps.
    """
    per_tp = 4 * (C * R + K + 2 * R + 2 * C + 16)
    fixed = 4 * 2 * C * R * K                   # src block (worst case double-buffered)
    cap = min(target_tp, _cdiv(HW, 128) * 128)
    avail = budget_bytes - fixed
    fit = 128 if avail <= per_tp * 128 else (avail // per_tp) // 128 * 128
    tp = max(128, min(cap, fit))
    # Keep at least two grid steps so both v7x TensorCores get work.
    if N * _cdiv(HW, tp) < 2 and HW > 128:
        tp = max(128, _cdiv(_cdiv(HW, 2), 128) * 128)
    return tp


def spatial_transformer(src, theta, mode="bilinear", tile_p=None):
    """src: [N, C, H, W], theta: [N, 2, 3] -> [N, C, H, W] (bilinear, align_corners=True)."""
    if mode != "bilinear":
        # TODO(synk): 'nearest' grid_sample mode not implemented.
        raise NotImplementedError("only bilinear mode is implemented")
    N, C, H, W = src.shape
    HW = H * W
    if src.dtype not in (jnp.float32, jnp.bfloat16):
        src = src.astype(jnp.float32)

    # Put the larger spatial axis on the MXU contraction (better K utilisation and
    # less lane-padding waste when H >> W).  The small axis is the streamed reduce.
    contract_x = W >= H
    if contract_x:
        K, R = W, H
        src2d = src.reshape(N, C * H, W)                        # rows (c, h), cols w
    else:
        K, R = H, W
        src2d = jnp.swapaxes(src, 2, 3).reshape(N, C * W, H)    # rows (c, w), cols h

    theta_flat = theta.astype(jnp.float32).reshape(N * 6)       # flat SMEM scalars

    if tile_p is None:
        tp = _pick_tile(HW, C, R, K, N)
    else:
        tp = max(128, _cdiv(int(tile_p), 128) * 128)
    n_tiles = _cdiv(HW, tp)
    HW_pad = n_tiles * tp

    est_bytes = 4 * ((C * R + K + 2 * R + 2 * C + 16) * tp + 2 * C * R * K)
    vmem_limit = int(min(64 * 2**20, max(32 * 2**20, 2 * est_bytes)))

    kernel = functools.partial(_stl_kernel, H=H, W=W, C=C, HW=HW, contract_x=contract_x)

    def call(single_buffer_src):
        src_kwargs = {}
        if single_buffer_src:
            # The source block index only changes with the batch axis; single-buffer it
            # to halve its VMEM footprint (matters most on v7x's 64 MiB VMEM).
            src_kwargs["pipeline_mode"] = pl.Buffered(1)
        return pl.pallas_call(
            kernel,
            out_shape=jax.ShapeDtypeStruct((N, C, HW_pad), src.dtype),
            grid_spec=pltpu.PrefetchScalarGridSpec(
                num_scalar_prefetch=1,
                grid=(N, n_tiles),
                in_specs=[pl.BlockSpec((1, C * R, K), lambda n, j, th: (n, 0, 0),
                                       **src_kwargs)],
                out_specs=pl.BlockSpec((1, C, tp), lambda n, j, th: (n, 0, j)),
            ),
            compiler_params=pltpu.CompilerParams(
                dimension_semantics=("parallel", "parallel"),
                vmem_limit_bytes=vmem_limit),
        )(theta_flat, src2d)

    try:
        out_flat = call(single_buffer_src=True)
    except Exception:
        # Fallback if this JAX build rejects pipeline_mode=pl.Buffered(1).
        out_flat = call(single_buffer_src=False)

    return out_flat[:, :, :HW].reshape(N, C, H, W)


def _reference(src, theta):
    """Pure-JAX reference of affine_grid + grid_sample (bilinear, align_corners=True)."""
    N, C, H, W = src.shape
    xs = jnp.linspace(-1.0, 1.0, W, dtype=jnp.float32)
    ys = jnp.linspace(-1.0, 1.0, H, dtype=jnp.float32)
    xg, yg = jnp.meshgrid(xs, ys)                                 # (H, W)
    ones = jnp.ones_like(xg)
    base = jnp.stack([xg, yg, ones], axis=-1).reshape(-1, 3)      # (HW, 3)
    grid = jnp.einsum("nij,pj->npi", theta.astype(jnp.float32), base)  # (N, HW, 2)
    gx, gy = grid[..., 0], grid[..., 1]
    ix = (gx + 1.0) * 0.5 * (W - 1)
    iy = (gy + 1.0) * 0.5 * (H - 1)

    def sample_one(img, ix1, iy1):  # img (C,H,W), coords (HW,)
        x0 = jnp.floor(ix1); y0 = jnp.floor(iy1)
        out = jnp.zeros((C, ix1.shape[0]), jnp.float32)
        for dx, dy in ((0, 0), (1, 0), (0, 1), (1, 1)):
            cx = x0 + dx; cy = y0 + dy
            w = (1 - jnp.abs(ix1 - cx)) * (1 - jnp.abs(iy1 - cy))
            valid = (cx >= 0) & (cx <= W - 1) & (cy >= 0) & (cy <= H - 1)
            w = jnp.where(valid, w, 0.0)
            flat = (jnp.clip(cy, 0, H - 1).astype(jnp.int32) * W
                    + jnp.clip(cx, 0, W - 1).astype(jnp.int32))
            out = out + w[None, :] * jnp.take(img.reshape(C, -1), flat, axis=1)
        return out.reshape(C, H, W)

    return jax.vmap(sample_one)(src.astype(jnp.float32), ix, iy)


if __name__ == "__main__":
    key = jax.random.PRNGKey(0)

    def make_theta(n):
        angles = jnp.linspace(0.1, -0.2, n)
        tx = jnp.linspace(0.05, -0.15, n)
        ty = jnp.linspace(-0.10, 0.20, n)
        sc = jnp.linspace(0.9, 1.1, n)
        cos, sin = jnp.cos(angles) * sc, jnp.sin(angles) * sc
        return jnp.stack(
            [jnp.stack([cos, -sin, tx], axis=-1),
             jnp.stack([sin, cos, ty], axis=-1)], axis=1).astype(jnp.float32)

    cases = [
        # (N, C, H,  W,  dtype,        tile_p, tol)
        (2, 4, 16, 16, jnp.float32, 128,  1e-4),   # multiple pixel tiles, no padding
        (2, 3, 12, 20, jnp.float32, None, 1e-4),   # W > H, padded HW (240 -> 256)
        (1, 2, 20, 12, jnp.float32, None, 1e-4),   # H > W: contraction over H, >=2 tiles
        (2, 4, 16, 16, jnp.bfloat16, None, 5e-2),  # bf16 src stays bf16 on the MXU
    ]
    for idx, (N, C, H, W, dtype, tile_p, tol) in enumerate(cases):
        k = jax.random.fold_in(key, idx)
        src = jax.random.normal(k, (N, C, H, W), dtype=jnp.float32)
        T = make_theta(N)
        out = spatial_transformer(src.astype(dtype), T, tile_p=tile_p)
        out = jax.block_until_ready(out)
        ref = _reference(src, T)
        if not jnp.allclose(out.astype(jnp.float32), ref, atol=tol, rtol=tol):
            err = jnp.max(jnp.abs(out.astype(jnp.float32) - ref))
            raise AssertionError(f"Pallas kernel mismatch on case {idx}: max err {err}")

    print("KERNEL_OK")
</pallas_src>

<mosaic_0001>
module attributes {stable_mosaic.version = 11 : i64} {
  func.func @_stl_kernel(%arg0: i32, %arg1: i32, %arg2: memref<12xf32, #tpu.memory_space<smem>>, %arg3: memref<1x64x16xf32, #tpu.memory_space<vmem>>, %arg4: memref<1x4x128xf32, #tpu.memory_space<vmem>>) attributes {dimension_semantics = [#tpu.dimension_semantics<parallel>, #tpu.dimension_semantics<parallel>], iteration_bounds = array<i64: 2, 2>, scalar_prefetch = 1 : i64, scratch_operands = 0 : i64, tpu.core_type = #tpu.core_type<tc>, window_params = [{pipeline_mode = #tpu.pipeline_mode<synchronous>, transform_indices = @transform_0, window_bounds = array<i64: 1, 64, 16>}, {transform_indices = @transform_1, window_bounds = array<i64: 1, 4, 128>}]} {
    %c6_i32 = arith.constant 6 : i32
    %0 = arith.muli %c6_i32, %arg0 : i32
    %c0_i32 = arith.constant 0 : i32
    %1 = arith.addi %0, %c0_i32 : i32
    %2 = arith.index_cast %1 : i32 to index
    %3 = memref.load %arg2[%2] : memref<12xf32, #tpu.memory_space<smem>>
    %c6_i32_0 = arith.constant 6 : i32
    %4 = arith.muli %c6_i32_0, %arg0 : i32
    %c1_i32 = arith.constant 1 : i32
    %5 = arith.addi %4, %c1_i32 : i32
    %6 = arith.index_cast %5 : i32 to index
    %7 = memref.load %arg2[%6] : memref<12xf32, #tpu.memory_space<smem>>
    %c6_i32_1 = arith.constant 6 : i32
    %8 = arith.muli %c6_i32_1, %arg0 : i32
    %c2_i32 = arith.constant 2 : i32
    %9 = arith.addi %8, %c2_i32 : i32
    %10 = arith.index_cast %9 : i32 to index
    %11 = memref.load %arg2[%10] : memref<12xf32, #tpu.memory_space<smem>>
    %c6_i32_2 = arith.constant 6 : i32
    %12 = arith.muli %c6_i32_2, %arg0 : i32
    %c3_i32 = arith.constant 3 : i32
    %13 = arith.addi %12, %c3_i32 : i32
    %14 = arith.index_cast %13 : i32 to index
    %15 = memref.load %arg2[%14] : memref<12xf32, #tpu.memory_space<smem>>
    %c6_i32_3 = arith.constant 6 : i32
    %16 = arith.muli %c6_i32_3, %arg0 : i32
    %c4_i32 = arith.constant 4 : i32
    %17 = arith.addi %16, %c4_i32 : i32
    %18 = arith.index_cast %17 : i32 to index
    %19 = memref.load %arg2[%18] : memref<12xf32, #tpu.memory_space<smem>>
    %c6_i32_4 = arith.constant 6 : i32
    %20 = arith.muli %c6_i32_4, %arg0 : i32
    %c5_i32 = arith.constant 5 : i32
    %21 = arith.addi %20, %c5_i32 : i32
    %22 = arith.index_cast %21 : i32 to index
    %23 = memref.load %arg2[%22] : memref<12xf32, #tpu.memory_space<smem>>
    %c128_i32 = arith.constant 128 : i32
    %24 = arith.muli %arg1, %c128_i32 : i32
    %25 = tpu.iota {dimensions = array<i32: 1>} : vector<1x128xi32>
    %26 = vector.broadcast %24 : i32 to vector<1x128xi32>
    %27 = arith.addi %26, %25 : vector<1x128xi32>
    %c255_i32 = arith.constant 255 : i32
    %28 = vector.broadcast %c255_i32 : i32 to vector<1x128xi32>
    %29 = arith.minsi %27, %28 : vector<1x128xi32>
    %30 = arith.sitofp %29 : vector<1x128xi32> to vector<1x128xf32>
    %cst = arith.constant 5.000000e-01 : f32
    %31 = vector.broadcast %cst : f32 to vector<1x128xf32>
    %32 = arith.addf %30, %31 : vector<1x128xf32>
    %cst_5 = arith.constant 6.250000e-02 : f32
    %33 = vector.broadcast %cst_5 : f32 to vector<1x128xf32>
    %34 = arith.mulf %32, %33 : vector<1x128xf32>
    %35 = math.floor %34 : vector<1x128xf32>
    %cst_6 = arith.constant 1.600000e+01 : f32
    %36 = vector.broadcast %cst_6 : f32 to vector<1x128xf32>
    %37 = arith.mulf %35, %36 : vector<1x128xf32>
    %38 = arith.subf %30, %37 : vector<1x128xf32>
    %cst_7 = arith.constant 0.13333334 : f32
    %39 = vector.broadcast %cst_7 : f32 to vector<1x128xf32>
    %40 = arith.mulf %38, %39 : vector<1x128xf32>
    %cst_8 = arith.constant 1.000000e+00 : f32
    %41 = vector.broadcast %cst_8 : f32 to vector<1x128xf32>
    %42 = arith.subf %40, %41 : vector<1x128xf32>
    %cst_9 = arith.constant 0.13333334 : f32
    %43 = vector.broadcast %cst_9 : f32 to vector<1x128xf32>
    %44 = arith.mulf %35, %43 : vector<1x128xf32>
    %cst_10 = arith.constant 1.000000e+00 : f32
    %45 = vector.broadcast %cst_10 : f32 to vector<1x128xf32>
    %46 = arith.subf %44, %45 : vector<1x128xf32>
    %47 = vector.broadcast %3 : f32 to vector<1x128xf32>
    %48 = arith.mulf %47, %42 : vector<1x128xf32>
    %49 = vector.broadcast %7 : f32 to vector<1x128xf32>
    %50 = arith.mulf %49, %46 : vector<1x128xf32>
    %51 = arith.addf %48, %50 : vector<1x128xf32>
    %52 = vector.broadcast %11 : f32 to vector<1x128xf32>
    %53 = arith.addf %51, %52 : vector<1x128xf32>
    %54 = vector.broadcast %15 : f32 to vector<1x128xf32>
    %55 = arith.mulf %54, %42 : vector<1x128xf32>
    %56 = vector.broadcast %19 : f32 to vector<1x128xf32>
    %57 = arith.mulf %56, %46 : vector<1x128xf32>
    %58 = arith.addf %55, %57 : vector<1x128xf32>
    %59 = vector.broadcast %23 : f32 to vector<1x128xf32>
    %60 = arith.addf %58, %59 : vector<1x128xf32>
    %cst_11 = arith.constant 1.000000e+00 : f32
    %61 = vector.broadcast %cst_11 : f32 to vector<1x128xf32>
    %62 = arith.addf %53, %61 : vector<1x128xf32>
    %cst_12 = arith.constant 7.500000e+00 : f32
    %63 = vector.broadcast %cst_12 : f32 to vector<1x128xf32>
    %64 = arith.mulf %62, %63 : vector<1x128xf32>
    %cst_13 = arith.constant 1.000000e+00 : f32
    %65 = vector.broadcast %cst_13 : f32 to vector<1x128xf32>
    %66 = arith.addf %60, %65 : vector<1x128xf32>
    %cst_14 = arith.constant 7.500000e+00 : f32
    %67 = vector.broadcast %cst_14 : f32 to vector<1x128xf32>
    %68 = arith.mulf %66, %67 : vector<1x128xf32>
    %69 = math.floor %64 : vector<1x128xf32>
    %70 = arith.subf %64, %69 : vector<1x128xf32>
    %cst_15 = arith.constant 0.000000e+00 : f32
    %71 = vector.broadcast %cst_15 : f32 to vector<1x128xf32>
    %72 = arith.cmpf oge, %69, %71 : vector<1x128xf32>
    %cst_16 = arith.constant 1.500000e+01 : f32
    %73 = vector.broadcast %cst_16 : f32 to vector<1x128xf32>
    %74 = arith.cmpf ole, %69, %73 : vector<1x128xf32>
    %75 = arith.andi %72, %74 : vector<1x128xi1>
    %cst_17 = arith.constant 1.000000e+00 : f32
    %76 = vector.broadcast %cst_17 : f32 to vector<1x128xf32>
    %77 = arith.subf %76, %70 : vector<1x128xf32>
    %cst_18 = arith.constant 0.000000e+00 : f32
    %78 = vector.broadcast %cst_18 : f32 to vector<1x128xf32>
    %79 = arith.select %75, %77, %78 : vector<1x128xi1>, vector<1x128xf32>
    %cst_19 = arith.constant -1.000000e+00 : f32
    %80 = vector.broadcast %cst_19 : f32 to vector<1x128xf32>
    %81 = arith.cmpf oge, %69, %80 : vector<1x128xf32>
    %cst_20 = arith.constant 1.400000e+01 : f32
    %82 = vector.broadcast %cst_20 : f32 to vector<1x128xf32>
    %83 = arith.cmpf ole, %69, %82 : vector<1x128xf32>
    %84 = arith.andi %81, %83 : vector<1x128xi1>
    %cst_21 = arith.constant 0.000000e+00 : f32
    %85 = vector.broadcast %cst_21 : f32 to vector<1x128xf32>
    %86 = arith.select %84, %70, %85 : vector<1x128xi1>, vector<1x128xf32>
    %cst_22 = arith.constant -1.000000e+00 : f32
    %cst_23 = arith.constant 1.600000e+01 : f32
    %87 = vector.broadcast %cst_22 : f32 to vector<1x128xf32>
    %88 = arith.maximumf %87, %69 : vector<1x128xf32>
    %89 = vector.broadcast %cst_23 : f32 to vector<1x128xf32>
    %90 = arith.minimumf %89, %88 : vector<1x128xf32>
    %91 = arith.fptosi %90 : vector<1x128xf32> to vector<1x128xi32>
    %92 = tpu.iota {dimensions = array<i32: 0>} : vector<16x128xi32>
    %93 = vector.broadcast %91 : vector<1x128xi32> to vector<16x128xi32>
    %94 = arith.cmpi eq, %92, %93 : vector<16x128xi32>
    %cst_24 = arith.constant 0.000000e+00 : f32
    %95 = vector.shape_cast %79 : vector<1x128xf32> to vector<1x128xf32>
    %96 = vector.broadcast %95 : vector<1x128xf32> to vector<16x128xf32>
    %97 = vector.broadcast %cst_24 : f32 to vector<16x128xf32>
    %98 = arith.select %94, %96, %97 : vector<16x128xi1>, vector<16x128xf32>
    %c1_i32_25 = arith.constant 1 : i32
    %99 = vector.broadcast %c1_i32_25 : i32 to vector<1x128xi32>
    %100 = arith.addi %91, %99 : vector<1x128xi32>
    %101 = vector.broadcast %100 : vector<1x128xi32> to vector<16x128xi32>
    %102 = arith.cmpi eq, %92, %101 : vector<16x128xi32>
    %cst_26 = arith.constant 0.000000e+00 : f32
    %103 = vector.shape_cast %86 : vector<1x128xf32> to vector<1x128xf32>
    %104 = vector.broadcast %103 : vector<1x128xf32> to vector<16x128xf32>
    %105 = vector.broadcast %cst_26 : f32 to vector<16x128xf32>
    %106 = arith.select %102, %104, %105 : vector<16x128xi1>, vector<16x128xf32>
    %107 = arith.addf %98, %106 : vector<16x128xf32>
    %108 = math.floor %68 : vector<1x128xf32>
    %109 = arith.subf %68, %108 : vector<1x128xf32>
    %cst_27 = arith.constant 0.000000e+00 : f32
    %110 = vector.broadcast %cst_27 : f32 to vector<1x128xf32>
    %111 = arith.cmpf oge, %108, %110 : vector<1x128xf32>
    %cst_28 = arith.constant 1.500000e+01 : f32
    %112 = vector.broadcast %cst_28 : f32 to vector<1x128xf32>
    %113 = arith.cmpf ole, %108, %112 : vector<1x128xf32>
    %114 = arith.andi %111, %113 : vector<1x128xi1>
    %cst_29 = arith.constant 1.000000e+00 : f32
    %115 = vector.broadcast %cst_29 : f32 to vector<1x128xf32>
    %116 = arith.subf %115, %109 : vector<1x128xf32>
    %cst_30 = arith.constant 0.000000e+00 : f32
    %117 = vector.broadcast %cst_30 : f32 to vector<1x128xf32>
    %118 = arith.select %114, %116, %117 : vector<1x128xi1>, vector<1x128xf32>
    %cst_31 = arith.constant -1.000000e+00 : f32
    %119 = vector.broadcast %cst_31 : f32 to vector<1x128xf32>
    %120 = arith.cmpf oge, %108, %119 : vector<1x128xf32>
    %cst_32 = arith.constant 1.400000e+01 : f32
    %121 = vector.broadcast %cst_32 : f32 to vector<1x128xf32>
    %122 = arith.cmpf ole, %108, %121 : vector<1x128xf32>
    %123 = arith.andi %120, %122 : vector<1x128xi1>
    %cst_33 = arith.constant 0.000000e+00 : f32
    %124 = vector.broadcast %cst_33 : f32 to vector<1x128xf32>
    %125 = arith.select %123, %109, %124 : vector<1x128xi1>, vector<1x128xf32>
    %cst_34 = arith.constant -1.000000e+00 : f32
    %cst_35 = arith.constant 1.600000e+01 : f32
    %126 = vector.broadcast %cst_34 : f32 to vector<1x128xf32>
    %127 = arith.maximumf %126, %108 : vector<1x128xf32>
    %128 = vector.broadcast %cst_35 : f32 to vector<1x128xf32>
    %129 = arith.minimumf %128, %127 : vector<1x128xf32>
    %130 = arith.fptosi %129 : vector<1x128xf32> to vector<1x128xi32>
    %131 = tpu.iota {dimensions = array<i32: 0>} : vector<16x128xi32>
    %132 = vector.broadcast %130 : vector<1x128xi32> to vector<16x128xi32>
    %133 = arith.cmpi eq, %131, %132 : vector<16x128xi32>
    %cst_36 = arith.constant 0.000000e+00 : f32
    %134 = vector.shape_cast %118 : vector<1x128xf32> to vector<1x128xf32>
    %135 = vector.broadcast %134 : vector<1x128xf32> to vector<16x128xf32>
    %136 = vector.broadcast %cst_36 : f32 to vector<16x128xf32>
    %137 = arith.select %133, %135, %136 : vector<16x128xi1>, vector<16x128xf32>
    %c1_i32_37 = arith.constant 1 : i32
    %138 = vector.broadcast %c1_i32_37 : i32 to vector<1x128xi32>
    %139 = arith.addi %130, %138 : vector<1x128xi32>
    %140 = vector.broadcast %139 : vector<1x128xi32> to vector<16x128xi32>
    %141 = arith.cmpi eq, %131, %140 : vector<16x128xi32>
    %cst_38 = arith.constant 0.000000e+00 : f32
    %142 = vector.shape_cast %125 : vector<1x128xf32> to vector<1x128xf32>
    %143 = vector.broadcast %142 : vector<1x128xf32> to vector<16x128xf32>
    %144 = vector.broadcast %cst_38 : f32 to vector<16x128xf32>
    %145 = arith.select %141, %143, %144 : vector<16x128xi1>, vector<16x128xf32>
    %146 = arith.addf %137, %145 : vector<16x128xf32>
    %c0 = arith.constant 0 : index
    %c0_39 = arith.constant 0 : index
    %c0_40 = arith.constant 0 : index
    %147 = vector.load %arg3[%c0, %c0_39, %c0_40] : memref<1x64x16xf32, #tpu.memory_space<vmem>>, vector<1x64x16xf32>
    %148 = vector.shape_cast %147 : vector<1x64x16xf32> to vector<64x16xf32>
    %cst_41 = arith.constant dense<0.000000e+00> : vector<64x128xf32>
    %149 = tpu.matmul %148, %107, %cst_41 {dimension_numbers = #tpu.dot_dimension_numbers<[1], [0], [0], [1], [0, 0, 1, 1], [], []>} : vector<64x16xf32>, vector<16x128xf32>, vector<64x128xf32> -> vector<64x128xf32>
    %150 = vector.extract_strided_slice %149 {offsets = [0, 0], sizes = [16, 128], strides = [1, 1]} : vector<64x128xf32> to vector<16x128xf32>
    %151 = arith.mulf %150, %146 : vector<16x128xf32>
    %cst_42 = arith.constant dense<0.000000e+00> : vector<128xf32>
    %152 = vector.multi_reduction <add>, %151, %cst_42 [0] : vector<16x128xf32> to vector<128xf32>
    %153 = vector.shape_cast %152 : vector<128xf32> to vector<1x128xf32>
    %154 = vector.extract_strided_slice %149 {offsets = [16, 0], sizes = [16, 128], strides = [1, 1]} : vector<64x128xf32> to vector<16x128xf32>
    %155 = arith.mulf %154, %146 : vector<16x128xf32>
    %cst_43 = arith.constant dense<0.000000e+00> : vector<128xf32>
    %156 = vector.multi_reduction <add>, %155, %cst_43 [0] : vector<16x128xf32> to vector<128xf32>
    %157 = vector.shape_cast %156 : vector<128xf32> to vector<1x128xf32>
    %158 = vector.extract_strided_slice %149 {offsets = [32, 0], sizes = [16, 128], strides = [1, 1]} : vector<64x128xf32> to vector<16x128xf32>
    %159 = arith.mulf %158, %146 : vector<16x128xf32>
    %cst_44 = arith.constant dense<0.000000e+00> : vector<128xf32>
    %160 = vector.multi_reduction <add>, %159, %cst_44 [0] : vector<16x128xf32> to vector<128xf32>
    %161 = vector.shape_cast %160 : vector<128xf32> to vector<1x128xf32>
    %162 = vector.extract_strided_slice %149 {offsets = [48, 0], sizes = [16, 128], strides = [1, 1]} : vector<64x128xf32> to vector<16x128xf32>
    %163 = arith.mulf %162, %146 : vector<16x128xf32>
    %cst_45 = arith.constant dense<0.000000e+00> : vector<128xf32>
    %164 = vector.multi_reduction <add>, %163, %cst_45 [0] : vector<16x128xf32> to vector<128xf32>
    %165 = vector.shape_cast %164 : vector<128xf32> to vector<1x128xf32>
    %166 = tpu.concatenate %153, %157, %161, %165 in 0 : vector<1x128xf32>, vector<1x128xf32>, vector<1x128xf32>, vector<1x128xf32> -> vector<4x128xf32>
    %c0_46 = arith.constant 0 : index
    %c0_47 = arith.constant 0 : index
    %c0_48 = arith.constant 0 : index
    %167 = vector.load %arg4[%c0_46, %c0_47, %c0_48] : memref<1x4x128xf32, #tpu.memory_space<vmem>>, vector<1x4x128xf32>
    %168 = vector.shape_cast %167 : vector<1x4x128xf32> to vector<4x128xf32>
    %169 = vector.shape_cast %166 : vector<4x128xf32> to vector<1x4x128xf32>
    tpu.vector_store %arg4[%c0_46, %c0_47, %c0_48], %169 {strides = array<i32>} : memref<1x4x128xf32, #tpu.memory_space<vmem>>, vector<1x4x128xf32>,
    return
  }
  func.func @transform_0(%arg0: i32, %arg1: i32, %arg2: memref<12xf32, #tpu.memory_space<smem>>) -> (i32, i32, i32) {
    %c0_i32 = arith.constant 0 : i32
    %c0_i32_0 = arith.constant 0 : i32
    %c0_i32_1 = arith.constant 0 : i32
    return %arg0, %c0_i32, %c0_i32_0 : i32, i32, i32
  }
  func.func @transform_1(%arg0: i32, %arg1: i32, %arg2: memref<12xf32, #tpu.memory_space<smem>>) -> (i32, i32, i32) {
    %c0_i32 = arith.constant 0 : i32
    %c0_i32_0 = arith.constant 0 : i32
    return %arg0, %c0_i32, %arg1 : i32, i32, i32
  }
}

module attributes {stable_mosaic.version = 11 : i64} {
  func.func @_stl_kernel(%arg0: i32, %arg1: i32, %arg2: memref<12xf32, #tpu.memory_space<smem>>, %arg3: memref<1x64x16xf32, #tpu.memory_space<vmem>>, %arg4: memref<1x4x128xf32, #tpu.memory_space<vmem>>) attributes {dimension_semantics = [#tpu.dimension_semantics<parallel>, #tpu.dimension_semantics<parallel>], iteration_bounds = array<i64: 2, 2>, scalar_prefetch = 1 : i64, scratch_operands = 0 : i64, tpu.core_type = #tpu.core_type<tc>, window_params = [{transform_indices = @transform_0, window_bounds = array<i64: 1, 64, 16>}, {transform_indices = @transform_1, window_bounds = array<i64: 1, 4, 128>}]} {
    %c6_i32 = arith.constant 6 : i32
    %0 = arith.muli %c6_i32, %arg0 : i32
    %c0_i32 = arith.constant 0 : i32
    %1 = arith.addi %0, %c0_i32 : i32
    %2 = arith.index_cast %1 : i32 to index
    %3 = memref.load %arg2[%2] : memref<12xf32, #tpu.memory_space<smem>>
    %c6_i32_0 = arith.constant 6 : i32
    %4 = arith.muli %c6_i32_0, %arg0 : i32
    %c1_i32 = arith.constant 1 : i32
    %5 = arith.addi %4, %c1_i32 : i32
    %6 = arith.index_cast %5 : i32 to index
    %7 = memref.load %arg2[%6] : memref<12xf32, #tpu.memory_space<smem>>
    %c6_i32_1 = arith.constant 6 : i32
    %8 = arith.muli %c6_i32_1, %arg0 : i32
    %c2_i32 = arith.constant 2 : i32
    %9 = arith.addi %8, %c2_i32 : i32
    %10 = arith.index_cast %9 : i32 to index
    %11 = memref.load %arg2[%10] : memref<12xf32, #tpu.memory_space<smem>>
    %c6_i32_2 = arith.constant 6 : i32
    %12 = arith.muli %c6_i32_2, %arg0 : i32
    %c3_i32 = arith.constant 3 : i32
    %13 = arith.addi %12, %c3_i32 : i32
    %14 = arith.index_cast %13 : i32 to index
    %15 = memref.load %arg2[%14] : memref<12xf32, #tpu.memory_space<smem>>
    %c6_i32_3 = arith.constant 6 : i32
    %16 = arith.muli %c6_i32_3, %arg0 : i32
    %c4_i32 = arith.constant 4 : i32
    %17 = arith.addi %16, %c4_i32 : i32
    %18 = arith.index_cast %17 : i32 to index
    %19 = memref.load %arg2[%18] : memref<12xf32, #tpu.memory_space<smem>>
    %c6_i32_4 = arith.constant 6 : i32
    %20 = arith.muli %c6_i32_4, %arg0 : i32
    %c5_i32 = arith.constant 5 : i32
    %21 = arith.addi %20, %c5_i32 : i32
    %22 = arith.index_cast %21 : i32 to index
    %23 = memref.load %arg2[%22] : memref<12xf32, #tpu.memory_space<smem>>
    %c128_i32 = arith.constant 128 : i32
    %24 = arith.muli %arg1, %c128_i32 : i32
    %25 = tpu.iota {dimensions = array<i32: 1>} : vector<1x128xi32>
    %26 = vector.broadcast %24 : i32 to vector<1x128xi32>
    %27 = arith.addi %26, %25 : vector<1x128xi32>
    %c255_i32 = arith.constant 255 : i32
    %28 = vector.broadcast %c255_i32 : i32 to vector<1x128xi32>
    %29 = arith.minsi %27, %28 : vector<1x128xi32>
    %30 = arith.sitofp %29 : vector<1x128xi32> to vector<1x128xf32>
    %cst = arith.constant 5.000000e-01 : f32
    %31 = vector.broadcast %cst : f32 to vector<1x128xf32>
    %32 = arith.addf %30, %31 : vector<1x128xf32>
    %cst_5 = arith.constant 6.250000e-02 : f32
    %33 = vector.broadcast %cst_5 : f32 to vector<1x128xf32>
    %34 = arith.mulf %32, %33 : vector<1x128xf32>
    %35 = math.floor %34 : vector<1x128xf32>
    %cst_6 = arith.constant 1.600000e+01 : f32
    %36 = vector.broadcast %cst_6 : f32 to vector<1x128xf32>
    %37 = arith.mulf %35, %36 : vector<1x128xf32>
    %38 = arith.subf %30, %37 : vector<1x128xf32>
    %cst_7 = arith.constant 0.13333334 : f32
    %39 = vector.broadcast %cst_7 : f32 to vector<1x128xf32>
    %40 = arith.mulf %38, %39 : vector<1x128xf32>
    %cst_8 = arith.constant 1.000000e+00 : f32
    %41 = vector.broadcast %cst_8 : f32 to vector<1x128xf32>
    %42 = arith.subf %40, %41 : vector<1x128xf32>
    %cst_9 = arith.constant 0.13333334 : f32
    %43 = vector.broadcast %cst_9 : f32 to vector<1x128xf32>
    %44 = arith.mulf %35, %43 : vector<1x128xf32>
    %cst_10 = arith.constant 1.000000e+00 : f32
    %45 = vector.broadcast %cst_10 : f32 to vector<1x128xf32>
    %46 = arith.subf %44, %45 : vector<1x128xf32>
    %47 = vector.broadcast %3 : f32 to vector<1x128xf32>
    %48 = arith.mulf %47, %42 : vector<1x128xf32>
    %49 = vector.broadcast %7 : f32 to vector<1x128xf32>
    %50 = arith.mulf %49, %46 : vector<1x128xf32>
    %51 = arith.addf %48, %50 : vector<1x128xf32>
    %52 = vector.broadcast %11 : f32 to vector<1x128xf32>
    %53 = arith.addf %51, %52 : vector<1x128xf32>
    %54 = vector.broadcast %15 : f32 to vector<1x128xf32>
    %55 = arith.mulf %54, %42 : vector<1x128xf32>
    %56 = vector.broadcast %19 : f32 to vector<1x128xf32>
    %57 = arith.mulf %56, %46 : vector<1x128xf32>
    %58 = arith.addf %55, %57 : vector<1x128xf32>
    %59 = vector.broadcast %23 : f32 to vector<1x128xf32>
    %60 = arith.addf %58, %59 : vector<1x128xf32>
    %cst_11 = arith.constant 1.000000e+00 : f32
    %61 = vector.broadcast %cst_11 : f32 to vector<1x128xf32>
    %62 = arith.addf %53, %61 : vector<1x128xf32>
    %cst_12 = arith.constant 7.500000e+00 : f32
    %63 = vector.broadcast %cst_12 : f32 to vector<1x128xf32>
    %64 = arith.mulf %62, %63 : vector<1x128xf32>
    %cst_13 = arith.constant 1.000000e+00 : f32
    %65 = vector.broadcast %cst_13 : f32 to vector<1x128xf32>
    %66 = arith.addf %60, %65 : vector<1x128xf32>
    %cst_14 = arith.constant 7.500000e+00 : f32
    %67 = vector.broadcast %cst_14 : f32 to vector<1x128xf32>
    %68 = arith.mulf %66, %67 : vector<1x128xf32>
    %69 = math.floor %64 : vector<1x128xf32>
    %70 = arith.subf %64, %69 : vector<1x128xf32>
    %cst_15 = arith.constant 0.000000e+00 : f32
    %71 = vector.broadcast %cst_15 : f32 to vector<1x128xf32>
    %72 = arith.cmpf oge, %69, %71 : vector<1x128xf32>
    %cst_16 = arith.constant 1.500000e+01 : f32
    %73 = vector.broadcast %cst_16 : f32 to vector<1x128xf32>
    %74 = arith.cmpf ole, %69, %73 : vector<1x128xf32>
    %75 = arith.andi %72, %74 : vector<1x128xi1>
    %cst_17 = arith.constant 1.000000e+00 : f32
    %76 = vector.broadcast %cst_17 : f32 to vector<1x128xf32>
    %77 = arith.subf %76, %70 : vector<1x128xf32>
    %cst_18 = arith.constant 0.000000e+00 : f32
    %78 = vector.broadcast %cst_18 : f32 to vector<1x128xf32>
    %79 = arith.select %75, %77, %78 : vector<1x128xi1>, vector<1x128xf32>
    %cst_19 = arith.constant -1.000000e+00 : f32
    %80 = vector.broadcast %cst_19 : f32 to vector<1x128xf32>
    %81 = arith.cmpf oge, %69, %80 : vector<1x128xf32>
    %cst_20 = arith.constant 1.400000e+01 : f32
    %82 = vector.broadcast %cst_20 : f32 to vector<1x128xf32>
    %83 = arith.cmpf ole, %69, %82 : vector<1x128xf32>
    %84 = arith.andi %81, %83 : vector<1x128xi1>
    %cst_21 = arith.constant 0.000000e+00 : f32
    %85 = vector.broadcast %cst_21 : f32 to vector<1x128xf32>
    %86 = arith.select %84, %70, %85 : vector<1x128xi1>, vector<1x128xf32>
    %cst_22 = arith.constant -1.000000e+00 : f32
    %cst_23 = arith.constant 1.600000e+01 : f32
    %87 = vector.broadcast %cst_22 : f32 to vector<1x128xf32>
    %88 = arith.maximumf %87, %69 : vector<1x128xf32>
    %89 = vector.broadcast %cst_23 : f32 to vector<1x128xf32>
    %90 = arith.minimumf %89, %88 : vector<1x128xf32>
    %91 = arith.fptosi %90 : vector<1x128xf32> to vector<1x128xi32>
    %92 = tpu.iota {dimensions = array<i32: 0>} : vector<16x128xi32>
    %93 = vector.broadcast %91 : vector<1x128xi32> to vector<16x128xi32>
    %94 = arith.cmpi eq, %92, %93 : vector<16x128xi32>
    %cst_24 = arith.constant 0.000000e+00 : f32
    %95 = vector.shape_cast %79 : vector<1x128xf32> to vector<1x128xf32>
    %96 = vector.broadcast %95 : vector<1x128xf32> to vector<16x128xf32>
    %97 = vector.broadcast %cst_24 : f32 to vector<16x128xf32>
    %98 = arith.select %94, %96, %97 : vector<16x128xi1>, vector<16x128xf32>
    %c1_i32_25 = arith.constant 1 : i32
    %99 = vector.broadcast %c1_i32_25 : i32 to vector<1x128xi32>
    %100 = arith.addi %91, %99 : vector<1x128xi32>
    %101 = vector.broadcast %100 : vector<1x128xi32> to vector<16x128xi32>
    %102 = arith.cmpi eq, %92, %101 : vector<16x128xi32>
    %cst_26 = arith.constant 0.000000e+00 : f32
    %103 = vector.shape_cast %86 : vector<1x128xf32> to vector<1x128xf32>
    %104 = vector.broadcast %103 : vector<1x128xf32> to vector<16x128xf32>
    %105 = vector.broadcast %cst_26 : f32 to vector<16x128xf32>
    %106 = arith.select %102, %104, %105 : vector<16x128xi1>, vector<16x128xf32>
    %107 = arith.addf %98, %106 : vector<16x128xf32>
    %108 = math.floor %68 : vector<1x128xf32>
    %109 = arith.subf %68, %108 : vector<1x128xf32>
    %cst_27 = arith.constant 0.000000e+00 : f32
    %110 = vector.broadcast %cst_27 : f32 to vector<1x128xf32>
    %111 = arith.cmpf oge, %108, %110 : vector<1x128xf32>
    %cst_28 = arith.constant 1.500000e+01 : f32
    %112 = vector.broadcast %cst_28 : f32 to vector<1x128xf32>
    %113 = arith.cmpf ole, %108, %112 : vector<1x128xf32>
    %114 = arith.andi %111, %113 : vector<1x128xi1>
    %cst_29 = arith.constant 1.000000e+00 : f32
    %115 = vector.broadcast %cst_29 : f32 to vector<1x128xf32>
    %116 = arith.subf %115, %109 : vector<1x128xf32>
    %cst_30 = arith.constant 0.000000e+00 : f32
    %117 = vector.broadcast %cst_30 : f32 to vector<1x128xf32>
    %118 = arith.select %114, %116, %117 : vector<1x128xi1>, vector<1x128xf32>
    %cst_31 = arith.constant -1.000000e+00 : f32
    %119 = vector.broadcast %cst_31 : f32 to vector<1x128xf32>
    %120 = arith.cmpf oge, %108, %119 : vector<1x128xf32>
    %cst_32 = arith.constant 1.400000e+01 : f32
    %121 = vector.broadcast %cst_32 : f32 to vector<1x128xf32>
    %122 = arith.cmpf ole, %108, %121 : vector<1x128xf32>
    %123 = arith.andi %120, %122 : vector<1x128xi1>
    %cst_33 = arith.constant 0.000000e+00 : f32
    %124 = vector.broadcast %cst_33 : f32 to vector<1x128xf32>
    %125 = arith.select %123, %109, %124 : vector<1x128xi1>, vector<1x128xf32>
    %cst_34 = arith.constant -1.000000e+00 : f32
    %cst_35 = arith.constant 1.600000e+01 : f32
    %126 = vector.broadcast %cst_34 : f32 to vector<1x128xf32>
    %127 = arith.maximumf %126, %108 : vector<1x128xf32>
    %128 = vector.broadcast %cst_35 : f32 to vector<1x128xf32>
    %129 = arith.minimumf %128, %127 : vector<1x128xf32>
    %130 = arith.fptosi %129 : vector<1x128xf32> to vector<1x128xi32>
    %131 = tpu.iota {dimensions = array<i32: 0>} : vector<16x128xi32>
    %132 = vector.broadcast %130 : vector<1x128xi32> to vector<16x128xi32>
    %133 = arith.cmpi eq, %131, %132 : vector<16x128xi32>
    %cst_36 = arith.constant 0.000000e+00 : f32
    %134 = vector.shape_cast %118 : vector<1x128xf32> to vector<1x128xf32>
    %135 = vector.broadcast %134 : vector<1x128xf32> to vector<16x128xf32>
    %136 = vector.broadcast %cst_36 : f32 to vector<16x128xf32>
    %137 = arith.select %133, %135, %136 : vector<16x128xi1>, vector<16x128xf32>
    %c1_i32_37 = arith.constant 1 : i32
    %138 = vector.broadcast %c1_i32_37 : i32 to vector<1x128xi32>
    %139 = arith.addi %130, %138 : vector<1x128xi32>
    %140 = vector.broadcast %139 : vector<1x128xi32> to vector<16x128xi32>
    %141 = arith.cmpi eq, %131, %140 : vector<16x128xi32>
    %cst_38 = arith.constant 0.000000e+00 : f32
    %142 = vector.shape_cast %125 : vector<1x128xf32> to vector<1x128xf32>
    %143 = vector.broadcast %142 : vector<1x128xf32> to vector<16x128xf32>
    %144 = vector.broadcast %cst_38 : f32 to vector<16x128xf32>
    %145 = arith.select %141, %143, %144 : vector<16x128xi1>, vector<16x128xf32>
    %146 = arith.addf %137, %145 : vector<16x128xf32>
    %c0 = arith.constant 0 : index
    %c0_39 = arith.constant 0 : index
    %c0_40 = arith.constant 0 : index
    %147 = vector.load %arg3[%c0, %c0_39, %c0_40] : memref<1x64x16xf32, #tpu.memory_space<vmem>>, vector<1x64x16xf32>
    %148 = vector.shape_cast %147 : vector<1x64x16xf32> to vector<64x16xf32>
    %cst_41 = arith.constant dense<0.000000e+00> : vector<64x128xf32>
    %149 = tpu.matmul %148, %107, %cst_41 {dimension_numbers = #tpu.dot_dimension_numbers<[1], [0], [0], [1], [0, 0, 1, 1], [], []>} : vector<64x16xf32>, vector<16x128xf32>, vector<64x128xf32> -> vector<64x128xf32>
    %150 = vector.extract_strided_slice %149 {offsets = [0, 0], sizes = [16, 128], strides = [1, 1]} : vector<64x128xf32> to vector<16x128xf32>
    %151 = arith.mulf %150, %146 : vector<16x128xf32>
    %cst_42 = arith.constant dense<0.000000e+00> : vector<128xf32>
    %152 = vector.multi_reduction <add>, %151, %cst_42 [0] : vector<16x128xf32> to vector<128xf32>
    %153 = vector.shape_cast %152 : vector<128xf32> to vector<1x128xf32>
    %154 = vector.extract_strided_slice %149 {offsets = [16, 0], sizes = [16, 128], strides = [1, 1]} : vector<64x128xf32> to vector<16x128xf32>
    %155 = arith.mulf %154, %146 : vector<16x128xf32>
    %cst_43 = arith.constant dense<0.000000e+00> : vector<128xf32>
    %156 = vector.multi_reduction <add>, %155, %cst_43 [0] : vector<16x128xf32> to vector<128xf32>
    %157 = vector.shape_cast %156 : vector<128xf32> to vector<1x128xf32>
    %158 = vector.extract_strided_slice %149 {offsets = [32, 0], sizes = [16, 128], strides = [1, 1]} : vector<64x128xf32> to vector<16x128xf32>
    %159 = arith.mulf %158, %146 : vector<16x128xf32>
    %cst_44 = arith.constant dense<0.000000e+00> : vector<128xf32>
    %160 = vector.multi_reduction <add>, %159, %cst_44 [0] : vector<16x128xf32> to vector<128xf32>
    %161 = vector.shape_cast %160 : vector<128xf32> to vector<1x128xf32>
    %162 = vector.extract_strided_slice %149 {offsets = [48, 0], sizes = [16, 128], strides = [1, 1]} : vector<64x128xf32> to vector<16x128xf32>
    %163 = arith.mulf %162, %146 : vector<16x128xf32>
    %cst_45 = arith.constant dense<0.000000e+00> : vector<128xf32>
    %164 = vector.multi_reduction <add>, %163, %cst_45 [0] : vector<16x128xf32> to vector<128xf32>
    %165 = vector.shape_cast %164 : vector<128xf32> to vector<1x128xf32>
    %166 = tpu.concatenate %153, %157, %161, %165 in 0 : vector<1x128xf32>, vector<1x128xf32>, vector<1x128xf32>, vector<1x128xf32> -> vector<4x128xf32>
    %c0_46 = arith.constant 0 : index
    %c0_47 = arith.constant 0 : index
    %c0_48 = arith.constant 0 : index
    %167 = vector.load %arg4[%c0_46, %c0_47, %c0_48] : memref<1x4x128xf32, #tpu.memory_space<vmem>>, vector<1x4x128xf32>
    %168 = vector.shape_cast %167 : vector<1x4x128xf32> to vector<4x128xf32>
    %169 = vector.shape_cast %166 : vector<4x128xf32> to vector<1x4x128xf32>
    tpu.vector_store %arg4[%c0_46, %c0_47, %c0_48], %169 {strides = array<i32>} : memref<1x4x128xf32, #tpu.memory_space<vmem>>, vector<1x4x128xf32>,
    return
  }
  func.func @transform_0(%arg0: i32, %arg1: i32, %arg2: memref<12xf32, #tpu.memory_space<smem>>) -> (i32, i32, i32) {
    %c0_i32 = arith.constant 0 : i32
    %c0_i32_0 = arith.constant 0 : i32
    %c0_i32_1 = arith.constant 0 : i32
    return %arg0, %c0_i32, %c0_i32_0 : i32, i32, i32
  }
  func.func @transform_1(%arg0: i32, %arg1: i32, %arg2: memref<12xf32, #tpu.memory_space<smem>>) -> (i32, i32, i32) {
    %c0_i32 = arith.constant 0 : i32
    %c0_i32_0 = arith.constant 0 : i32
    return %arg0, %c0_i32, %arg1 : i32, i32, i32
  }
}

</mosaic_0001>

<llo_original>
// kernel: tpu_custom_call.1
$region0: #{tpu_custom_call.1}
  #allocation0 [shape = 'u32[]', space=smem, size = 0x4, offset = 0x4, fixed_abs, tag = 'smem constant byte address 0x4 - core index']
  #allocation1 [shape = 'u32[144,128]{1,0:T(1,128)}', space=vmem, size = 0x12000, scoped, tag = 'internal scratch']
  #allocation2 [shape = 's32[1]{0}', space=sflag, size = 0x4, scoped, tag = 'scoped memory for tpu_custom_call.1']
  #allocation3 [shape = 'u8[512]{0}', space=smem, size = 0x200, scoped, tag = 'prefetched SMEM operand 0']
  %s0 = inlined_call_operand.vmem [shape: f32[12], index: 0, kind: input, shape index: {}]
  %s1 = inlined_call_operand.vmem [shape: f32[2,64,16], index: 1, kind: input, shape index: {}]
  %s2 = inlined_call_operand.hbm [shape: f32[2,4,256], index: 2, kind: output, shape index: {}]
  %s3 = sld [smem:[#allocation0]]
  $region37: #{tpu_custom_call.1} parent=0
    _
  %s5 = ssub.s32 1, %s3
  %s6 = scalar_select 0, %s5, %s3
  %s7 = sshll.u32 %s0, 4
  %s8 = int_to_ptr.vmem [resolvable:$true] %s7
  %10 = dma.vmem_to_smem %s8, 16, [#allocation3], [#allocation2]
  %11 = dma.done [#allocation2], 16
  %12 = sfence
  $region1: #{tpu_custom_call.1} parent=0
    #allocation4 [shape = 'u8[4096]{0}', space=vmem, size = 0x1000, scoped, tag = 'output window, operand 0']
    #allocation5 [shape = 's32[2]{0}', space=sflag, size = 0x8, scoped, tag = 'scoped memory for tpu_custom_call.1']
    %13 = vsyncpa [#allocation5], 0
    %s14 = scalar_lea.sflag [#allocation5], 1
    %15 = vsyncpa %s14, 0
    loop: start=0, step=1, limit=6
    $region2: #{tpu_custom_call.1} parent=1 // loop_pre_header
      _
    $region3: #{tpu_custom_call.1} parent=1 // loop_header
      %s17 = sphi 0, %s21
      %p18 = scmp.ge.s32.totalorder %s17, 6
      %s24 = sphi 0, %s36
      %s25 = sphi 0, %s32
      %s26 = sphi 0, %s24
      %s27 = sphi 0, %s25
      %s28 = sphi 0, %s26
      %s29 = sphi 0, %s27
      %s39 = sphi 0, %s41
      %s42 = sphi 0, %s39
      %s43 = sphi 0, %s42
      %s59 = sphi 0, %s43
      %s67 = sphi 0, %s69
      %s70 = sphi 0, %s67
      %s71 = sphi 0, %s70
      %s87 = sphi 0, %s71
    $region4: #{tpu_custom_call.1} parent=1 // loop_header_branch
      %20 = sbr.rel (%p18) target = $region8
    $region5: #{tpu_custom_call.1} parent=1 // loop_body
      %s22 = ssub.s32 %s17, 1
      %s23 = ssub.s32 %s17, 2
      %s30 = sadd.s32 1, %s25
      %p31 = scmp.ge.s32.totalorder %s30, 2
      %s32 = scalar_select %p31, 0, %s30
      %s33 = sadd.s32 1, %s24
      %s34 = scalar_select %p31, %s33, %s24
      %p35 = scmp.ge.s32.totalorder %s34, 2
      %s36 = scalar_select %p35, 0, %s34
      %s37 = ssub.s32 %s24, %s36
      %p38 = scmp.eq.s32.totalorder %s37, 0
      %s40 = sadd.s32 %s39, 1
      %s41 = scalar_select %p38, %s39, %s40
      %p44 = pneg %p38
      %p45 = scmp.eq.s32.totalorder %s17, 3
      %p46 = por %p44, %p45
      %p47 = scmp.ne.s32.totalorder %s39, %s42
      %p48 = scmp.eq.s32.totalorder %s17, 0
      %p49 = por %p47, %p48
      %p50 = scmp.ne.s32.totalorder %s39, %s42
      %p51 = scmp.eq.s32.totalorder %s22, 3
      %p52 = por %p50, %p51
      %p53 = scmp.ne.s32.totalorder %s42, %s43
      %p54 = scmp.eq.s32.totalorder %s22, 0
      %p55 = por %p53, %p54
      %p56 = scmp.ne.s32.totalorder %s42, %s43
      %p57 = scmp.eq.s32.totalorder %s23, 3
      %p58 = por %p56, %p57
      %p60 = scmp.ne.s32.totalorder %s43, %s59
      %p61 = scmp.eq.s32.totalorder %s23, 0
      %p62 = por %p60, %p61
      %s63 = ssub.s32 %s24, %s36
      %s64 = ssub.s32 %s25, %s32
      %s65 = sor.u32 %s63, %s64
      %p66 = scmp.eq.s32.totalorder %s65, 0
      %s68 = sadd.s32 %s67, 1
      %s69 = scalar_select %p66, %s67, %s68
      %p72 = pneg %p66
      %p73 = scmp.eq.s32.totalorder %s17, 3
      %p74 = por %p72, %p73
      %p75 = scmp.ne.s32.totalorder %s67, %s70
      %p76 = scmp.eq.s32.totalorder %s17, 0
      %p77 = por %p75, %p76
      %p78 = scmp.ne.s32.totalorder %s67, %s70
      %p79 = scmp.eq.s32.totalorder %s22, 3
      %p80 = por %p78, %p79
      %p81 = scmp.ne.s32.totalorder %s70, %s71
      %p82 = scmp.eq.s32.totalorder %s22, 0
      %p83 = por %p81, %p82
      %p84 = scmp.ne.s32.totalorder %s70, %s71
      %p85 = scmp.eq.s32.totalorder %s23, 3
      %p86 = por %p84, %p85
      %p88 = scmp.ne.s32.totalorder %s71, %s87
      %p89 = scmp.eq.s32.totalorder %s23, 0
      %p90 = por %p88, %p89
      %p91 = scmp.le.s32.totalorder 1, %s17
      %p92 = scmp.lt.s32.totalorder %s17, 5
      %p93 = pnand %p91, %p92
      %p94 = pneg %p93
      // Predicated region
      $region9: #{tpu_custom_call.1} parent=5 // pred_check
        _
      $region10: #{tpu_custom_call.1} parent=5 // pred_check_branch
        %96 = sbr.rel (%p93) target = $region12
      $region11: #{tpu_custom_call.1} parent=5 // pred_region
        %s97 = ssub.s32 %s17, 1
        // Predicated region
        $region13: #{tpu_custom_call.1} parent=11 // pred_check
          %p98 = pneg %p55
        $region14: #{tpu_custom_call.1} parent=11 // pred_check_branch
          %100 = sbr.rel (%p98) target = $region16
        $region15: #{tpu_custom_call.1} parent=11 // pred_region
          %p101 = scmp.lt.s32.totalorder %s26, 1
          %s102 = scalar_select %p101, %s26, 1
          %s103 = smul.addr %s102, 8
          %s104 = smul.addr %s103, 8
          %s105 = scalar_lea.vmem %s1, %s104
        $region16: #{tpu_custom_call.1} parent=11 // pred_fallthru
          _
      $region12: #{tpu_custom_call.1} parent=5 // pred_fallthru
        _
      %p106 = scmp.lt.s32.totalorder %s17, 4
      // Predicated region
      $region17: #{tpu_custom_call.1} parent=5 // pred_check
        %p107 = pneg %p106
      $region18: #{tpu_custom_call.1} parent=5 // pred_check_branch
        %109 = sbr.rel (%p107) target = $region20
      $region19: #{tpu_custom_call.1} parent=5 // pred_region
        _
      $region20: #{tpu_custom_call.1} parent=5 // pred_fallthru
        _
      %p110 = scmp.le.s32.totalorder 1, %s17
      %p111 = scmp.lt.s32.totalorder %s17, 5
      %p112 = pnand %p110, %p111
      %p113 = pneg %p112
      // Predicated region
      $region21: #{tpu_custom_call.1} parent=5 // pred_check
        _
      $region22: #{tpu_custom_call.1} parent=5 // pred_check_branch
        %115 = sbr.rel (%p112) target = $region24
      $region23: #{tpu_custom_call.1} parent=5 // pred_region
        %s116 = ssub.s32 %s17, 1
        %p117 = scmp.lt.s32.totalorder %s26, 1
        %s118 = scalar_select %p117, %s26, 1
        %s119 = smul.addr %s118, 8
        %s120 = smul.addr %s119, 8
        %s121 = scalar_lea.vmem %s1, %s120
        %p122 = pneg %p55
        %p123 = pneg %p52
        %p124 = pneg %p83
        %p125 = pneg %p80
        %s126 = sand.u32 %s70, 1
        %s127 = scalar_lea.sflag [#allocation5], %s126
        %s128 = sand.u32 %s70, 1
        %s129 = smul.addr %s128, 4
        %s130 = scalar_lea.vmem [#allocation4], %s129
        %p131 = scmp.lt.s32.totalorder %s26, 1
        %s132 = scalar_select %p131, %s26, 1
        %s133 = smul.addr %s132, 8
        %s134 = smul.addr %s133, 8
        %s135 = scalar_lea.vmem %s1, %s134
        %s136 = smul.u32 %s26, 6
        %s137 = sld [smem:[#allocation3 + %s136]]
        %s138 = sadd.s32 %s136, 1
        %s139 = sld [smem:[#allocation3 + %s138]]
        %s140 = sadd.s32 %s136, 2
        %s141 = sld [smem:[#allocation3 + %s140]]
        %s142 = sadd.s32 %s136, 3
        %s143 = sld [smem:[#allocation3 + %s142]]
        %s144 = sadd.s32 %s136, 4
        %s145 = sld [smem:[#allocation3 + %s144]]
        %s146 = sadd.s32 %s136, 5
        %s147 = sld [smem:[#allocation3 + %s146]]
        %s148 = smul.u32 %s27, 128
        %v149 = vlaneseq
        %v150 = vand.u32 %v149, 127
        %v151 = vstv %s148
        %v152 = vadd.s32 %v151, %v150
        %vm153 = vcmp.lt.s32.totalorder %v152, 255
        %v154 = vsel %vm153, %v152, 255
        %v155 = vcvt.s32.f32 %v154
        %v156 = vadd.f32 %v155, 0.5
        %v157 = vmul.f32 %v156, 0.0625
        %v158 = vfloor.f32 %v157
        %v159 = vmul.f32 %v158, 16.0
        %v160 = vsub.f32 %v155, %v159
        %v161 = vmul.f32 %v160, 0.13333334
        %v162 = vsub.f32 %v161, 1.0
        %v163 = vmul.f32 %v158, 0.13333334
        %v164 = vsub.f32 %v163, 1.0
        %v165 = vstv %s137
        %v166 = vmul.f32 %v165, %v162
        %v167 = vstv %s139
        %v168 = vmul.f32 %v167, %v164
        %v169 = vadd.f32 %v166, %v168
        %v170 = vstv %s141
        %v171 = vadd.f32 %v169, %v170
        %v172 = vstv %s143
        %v173 = vmul.f32 %v172, %v162
        %v174 = vstv %s145
        %v175 = vmul.f32 %v174, %v164
        %v176 = vadd.f32 %v173, %v175
        %v177 = vstv %s147
        %v178 = vadd.f32 %v176, %v177
        %v179 = vadd.f32 %v171, 1.0
        %v180 = vmul.f32 %v179, 7.5
        %v181 = vadd.f32 %v178, 1.0
        %v182 = vmul.f32 %v181, 7.5
        %v183 = vfloor.f32 %v180
        %v184 = vsub.f32 %v180, %v183
        %vm185 = vcmp.ge.f32.partialorder %v183, 0.0
        %vm186 = vcmp.le.f32.partialorder %v183, 15.0
        %vm187 = vmand %vm185, %vm186
        %v188 = vsub.f32 1.0, %v184
        %v189 = vsel %vm187, %v188, 0.0
        %vm190 = vcmp.ge.f32.partialorder %v183, -1.0
        %vm191 = vcmp.le.f32.partialorder %v183, 14.0
        %vm192 = vmand %vm190, %vm191
        %v193 = vsel %vm192, %v184, 0.0
        %v194 = vmax.f32 %v183, -1.0
        %v195 = vmin.f32 %v194, 16.0
        %v196 = vcvt.f32.s32.to.zero.pseudo %v195
        %v197 = vlaneseq
        %v198 = vshrl.u32 %v197, 7
        %v199 = vadd.s32 %v198, 8
        %vm200 = vcmp.eq.s32.totalorder %v198, %v196
        %vm201 = vcmp.eq.s32.totalorder %v199, %v196
        %v202 = vsel %vm200, %v189, 0.0
        %v203 = vsel %vm201, %v189, 0.0
        %v204 = vadd.s32 %v196, 1
        %vm205 = vcmp.eq.s32.totalorder %v198, %v204
        %vm206 = vcmp.eq.s32.totalorder %v199, %v204
        %v207 = vsel %vm205, %v193, 0.0
        %v208 = vsel %vm206, %v193, 0.0
        %v209 = vadd.f32 %v202, %v207
        %v210 = vadd.f32 %v203, %v208
        %v211 = vfloor.f32 %v182
        %v212 = vsub.f32 %v182, %v211
        %vm213 = vcmp.ge.f32.partialorder %v211, 0.0
        %vm214 = vcmp.le.f32.partialorder %v211, 15.0
        %vm215 = vmand %vm213, %vm214
        %v216 = vsub.f32 1.0, %v212
        %v217 = vsel %vm215, %v216, 0.0
        %vm218 = vcmp.ge.f32.partialorder %v211, -1.0
        %vm219 = vcmp.le.f32.partialorder %v211, 14.0
        %vm220 = vmand %vm218, %vm219
        %v221 = vsel %vm220, %v212, 0.0
        %v222 = vmax.f32 %v211, -1.0
        %v223 = vmin.f32 %v222, 16.0
        %v224 = vcvt.f32.s32.to.zero.pseudo %v223
        %vm225 = vcmp.eq.s32.totalorder %v198, %v224
        %vm226 = vcmp.eq.s32.totalorder %v199, %v224
        %v227 = vsel %vm225, %v217, 0.0
        %v228 = vsel %vm226, %v217, 0.0
        %v229 = vadd.s32 %v224, 1
        %vm230 = vcmp.eq.s32.totalorder %v198, %v229
        %vm231 = vcmp.eq.s32.totalorder %v199, %v229
        %v232 = vsel %vm230, %v221, 0.0
        %v233 = vsel %vm231, %v221, 0.0
        %v234 = vadd.f32 %v227, %v232
        %v235 = vadd.f32 %v228, %v233
        %v236 = vld [vmem:[%s135] sm:$0xff]
        %v237 = vld [vmem:[%s135 + $0x8] sm:$0xff]
        %v238 = vld [vmem:[%s135 + $0x10] sm:$0xff]
        %v239 = vld [vmem:[%s135 + $0x18] sm:$0xff]
        %v240 = vld [vmem:[%s135 + $0x20] sm:$0xff]
        %v241 = vld [vmem:[%s135 + $0x28] sm:$0xff]
        %v242 = vld [vmem:[%s135 + $0x30] sm:$0xff]
        %v243 = vld [vmem:[%s135 + $0x38] sm:$0xff]
        %vm244 = vcmask 130048
        %v246 = vsel %vm244, %v236, 0
        %v249 = vsel %vm244, %v237, 0
        %v252 = vsel %vm244, %v238, 0
        %v255 = vsel %vm244, %v239, 0
        %v258 = vsel %vm244, %v240, 0
        %v261 = vsel %vm244, %v241, 0
        %v264 = vsel %vm244, %v242, 0
        %v267 = vsel %vm244, %v243, 0
        %269 = vmatprep.subr.mxu0 0.0
        %270 = vmatpush1.msra.mxu0 %v209
        %271 = vmatprep.subr.mxu0 0.0
        %272 = vmatpush1.msra.mxu0 %v210
        %273 = vmatprep.subr.mxu0 0.0
        %274 = vmatpush1.msra.mxu0 0.0
        %275 = vmatprep.subr.mxu0 0.0
        %276 = vmatpush1.msra.mxu0 0.0
        %277 = vmatprep.subr.mxu0 0.0
        %278 = vmatpush1.msra.mxu0 0.0
        %279 = vmatprep.subr.mxu0 0.0
        %280 = vmatpush1.msra.mxu0 0.0
        %281 = vmatprep.subr.mxu0 0.0
        %282 = vmatpush1.msra.mxu0 0.0
        %283 = vmatprep.subr.mxu0 0.0
        %284 = vmatpush1.msra.mxu0 0.0
        %285 = vmatprep.subr.mxu0 0.0
        %286 = vmatpush1.msra.mxu0 0.0
        %287 = vmatprep.subr.mxu0 0.0
        %288 = vmatpush1.msra.mxu0 0.0
        %289 = vmatprep.subr.mxu0 0.0
        %290 = vmatpush1.msra.mxu0 0.0
        %291 = vmatprep.subr.mxu0 0.0
        %292 = vmatpush1.msra.mxu0 0.0
        %293 = vmatprep.subr.mxu0 0.0
        %294 = vmatpush1.msra.mxu0 0.0
        %295 = vmatprep.subr.mxu0 0.0
        %296 = vmatpush1.msra.mxu0 0.0
        %297 = vmatprep.subr.mxu0 0.0
        %298 = vmatpush1.msra.mxu0 0.0
        %299 = vmatprep.subr.mxu0 0.0
        %300 = vmatpush1.msra.mxu0 0.0
        %301 = vmatprep.subr.mxu0 0.0
        %302 = vmatpush1.msra.mxu0 0.0
        %303 = vmatprep.subr.mxu0 0.0
        %304 = vmatpush1.msra.mxu0 0.0
        %305 = vmatprep.subr.mxu0 0.0
        %306 = vmatpush1.msra.mxu0 0.0
        %307 = vmatprep.subr.mxu0 0.0
        %308 = vmatpush1.msra.mxu0 0.0
        %309 = vmatprep.subr.mxu0 0.0
        %310 = vmatpush1.msra.mxu0 0.0
        %311 = vmatprep.subr.mxu0 0.0
        %312 = vmatpush1.msra.mxu0 0.0
        %313 = vmatprep.subr.mxu0 0.0
        %314 = vmatpush1.msra.mxu0 0.0
        %315 = vmatprep.subr.mxu0 0.0
        %316 = vmatpush1.msra.mxu0 0.0
        %317 = vmatprep.subr.mxu0 0.0
        %318 = vmatpush1.msra.mxu0 0.0
        %319 = vmatprep.subr.mxu0 0.0
        %320 = vmatpush1.msra.mxu0 0.0
        %321 = vmatprep.subr.mxu0 0.0
        %322 = vmatpush1.msra.mxu0 0.0
        %323 = vmatprep.subr.mxu0 0.0
        %324 = vmatpush1.msra.mxu0 0.0
        %325 = vmatprep.subr.mxu0 0.0
        %326 = vmatpush1.msra.mxu0 0.0
        %327 = vmatprep.subr.mxu0 0.0
        %328 = vmatpush1.msra.mxu0 0.0
        %329 = vmatprep.subr.mxu0 0.0
        %330 = vmatpush1.msra.mxu0 0.0
        %331 = vmatprep.subr.mxu0 0.0
        %332 = vmatpush1.msra.mxu0 0.0
        %333 = vmatprep.mubr.f32.mxu0 0.0
        %334 = vmatmul.mubr.f32.gmra.mrb[0].mxu0 %v246
        %v335 = vpop.f32.mrb[0].mxu0
        %v336 = vadd.f32 0.0, %v335
        %v337 = vpop.f32.mrb[0].mxu0
        %338 = vmatprep.mubr.f32.mxu0 0.0
        %339 = vmatmul.mubr.f32.gmra.mrb[0].mxu0 %v249
        %v340 = vpop.f32.mrb[0].mxu0
        %v341 = vadd.f32 0.0, %v340
        %v342 = vpop.f32.mrb[0].mxu0
        %343 = vmatprep.mubr.f32.mxu0 0.0
        %344 = vmatmul.mubr.f32.gmra.mrb[0].mxu0 %v252
        %v345 = vpop.f32.mrb[0].mxu0
        %v346 = vadd.f32 0.0, %v345
        %v347 = vpop.f32.mrb[0].mxu0
        %348 = vmatprep.mubr.f32.mxu0 0.0
        %349 = vmatmul.mubr.f32.gmra.mrb[0].mxu0 %v255
        %v350 = vpop.f32.mrb[0].mxu0
        %v351 = vadd.f32 0.0, %v350
        %v352 = vpop.f32.mrb[0].mxu0
        %353 = vmatprep.mubr.f32.mxu0 0.0
        %354 = vmatmul.mubr.f32.gmra.mrb[0].mxu0 %v258
        %v355 = vpop.f32.mrb[0].mxu0
        %v356 = vadd.f32 0.0, %v355
        %v357 = vpop.f32.mrb[0].mxu0
        %358 = vmatprep.mubr.f32.mxu0 0.0
        %359 = vmatmul.mubr.f32.gmra.mrb[0].mxu0 %v261
        %v360 = vpop.f32.mrb[0].mxu0
        %v361 = vadd.f32 0.0, %v360
        %v362 = vpop.f32.mrb[0].mxu0
        %363 = vmatprep.mubr.f32.mxu0 0.0
        %364 = vmatmul.mubr.f32.gmra.mrb[0].mxu0 %v264
        %v365 = vpop.f32.mrb[0].mxu0
        %v366 = vadd.f32 0.0, %v365
        %v367 = vpop.f32.mrb[0].mxu0
        %368 = vmatprep.mubr.f32.mxu0 0.0
        %369 = vmatmul.mubr.f32.gmra.mrb[0].mxu0 %v267
        %v370 = vpop.f32.mrb[0].mxu0
        %v371 = vadd.f32 0.0, %v370
        %v372 = vpop.f32.mrb[0].mxu0
        %373 = vdwg.mxu0
        %v374 = vmul.f32 %v336, %v234
        %v375 = vmul.f32 %v341, %v235
        %v376 = vadd.f32 %v374, %v375
        %v377 = vrot.slane %v376, 4
        %v378 = vadd.f32 %v376, %v377
        %v379 = vrot.slane %v378, 2
        %v380 = vadd.f32 %v378, %v379
        %v381 = vrot.slane %v380, 1
        %v382 = vadd.f32 %v380, %v381
        %v383 = vmul.f32 %v346, %v234
        %v384 = vmul.f32 %v351, %v235
        %v385 = vadd.f32 %v383, %v384
        %v386 = vrot.slane %v385, 4
        %v387 = vadd.f32 %v385, %v386
        %v388 = vrot.slane %v387, 2
        %v389 = vadd.f32 %v387, %v388
        %v390 = vrot.slane %v389, 1
        %v391 = vadd.f32 %v389, %v390
        %v392 = vmul.f32 %v356, %v234
        %v393 = vmul.f32 %v361, %v235
        %v394 = vadd.f32 %v392, %v393
        %v395 = vrot.slane %v394, 4
        %v396 = vadd.f32 %v394, %v395
        %v397 = vrot.slane %v396, 2
        %v398 = vadd.f32 %v396, %v397
        %v399 = vrot.slane %v398, 1
        %v400 = vadd.f32 %v398, %v399
        %v401 = vmul.f32 %v366, %v234
        %v402 = vmul.f32 %v371, %v235
        %v403 = vadd.f32 %v401, %v402
        %v404 = vrot.slane %v403, 4
        %v405 = vadd.f32 %v403, %v404
        %v406 = vrot.slane %v405, 2
        %v407 = vadd.f32 %v405, %v406
        %v408 = vrot.slane %v407, 1
        %v409 = vadd.f32 %v407, %v408
        %vm410 = vcmask 1040384
        %v411 = vsel %vm410, %v382, %v391
        %vm412 = vcmask 1041408
        %v413 = vsel %vm412, %v411, %v400
        %vm414 = vcmask 1042432
        %v415 = vsel %vm414, %v413, %v409
        %416 = vst [vmem:[%s130] sm:$0xf] %v415
        %s417 = sand.u32 %s70, 1
        %s418 = scalar_lea.sflag [#allocation5], %s417
        %s419 = sand.u32 %s70, 1
        %s420 = smul.addr %s419, 4
        %s421 = scalar_lea.vmem [#allocation4], %s420
        // Predicated region
        $region25: #{tpu_custom_call.1} parent=23 // pred_check
          %p422 = pneg %p80
        $region26: #{tpu_custom_call.1} parent=23 // pred_check_branch
          %424 = sbr.rel (%p422) target = $region28
        $region27: #{tpu_custom_call.1} parent=23 // pred_region
          %s426 = ssub.s32 64, 64
          %427 = vsyncadd %s418, %s426
          %s428 = smul.addr %s26, 2
          %s429 = sadd.s32 %s27, %s428
          %s430 = smul.addr %s429, 64
          %s431 = scalar_lea.hbm %s2, %s430
          %s433 = sshll.u32 %s421, 4
          %s434 = int_to_ptr.vmem [resolvable:$true] %s433
          %436 = dma.vmem_to_hbm [thread:$0]  %s434, 64, %s431, %s418
        $region28: #{tpu_custom_call.1} parent=23 // pred_fallthru
          _
      $region24: #{tpu_custom_call.1} parent=5 // pred_fallthru
        _
      %p437 = scmp.le.s32.totalorder 2, %s17
      // Predicated region
      $region29: #{tpu_custom_call.1} parent=5 // pred_check
        %p438 = pneg %p437
      $region30: #{tpu_custom_call.1} parent=5 // pred_check_branch
        %440 = sbr.rel (%p438) target = $region32
      $region31: #{tpu_custom_call.1} parent=5 // pred_region
        %s441 = ssub.s32 %s17, 2
        // Predicated region
        $region33: #{tpu_custom_call.1} parent=31 // pred_check
          %p442 = pneg %p86
        $region34: #{tpu_custom_call.1} parent=31 // pred_check_branch
          %444 = sbr.rel (%p442) target = $region36
        $region35: #{tpu_custom_call.1} parent=31 // pred_region
          %s445 = sand.u32 %s71, 1
          %s446 = scalar_lea.sflag [#allocation5], %s445
          %s447 = sand.u32 %s71, 1
          %s448 = smul.addr %s447, 4
          %s449 = scalar_lea.vmem [#allocation4], %s448
          %450 = dma.done %s446, 64
        $region36: #{tpu_custom_call.1} parent=31 // pred_fallthru
          _
      $region32: #{tpu_custom_call.1} parent=5 // pred_fallthru
        _
    $region6: #{tpu_custom_call.1} parent=1 // loop_footer
      %s21 = sadd.s32 1, %s17
    $region7: #{tpu_custom_call.1} parent=1 // loop_footer_branch
      %16 = sbr.rel target = $region3
    $region8: #{tpu_custom_call.1} parent=1 // loop_exit
      _
    %451 = vsyncpa [#allocation5], 1
    %s452 = scalar_lea.sflag [#allocation5], 1
    %453 = vsyncpa %s452, 1

// kernel: tpu_custom_call.1
$region0: #{tpu_custom_call.1}
  #allocation0 [shape = 'u32[]', space=smem, size = 0x4, offset = 0x4, fixed_abs, tag = 'smem constant byte address 0x4 - core index']
  #allocation1 [shape = 'u32[144,128]{1,0:T(1,128)}', space=vmem, size = 0x12000, scoped, tag = 'internal scratch']
  #allocation2 [shape = 's32[1]{0}', space=sflag, size = 0x4, scoped, tag = 'scoped memory for tpu_custom_call.1']
  #allocation3 [shape = 'u8[512]{0}', space=smem, size = 0x200, scoped, tag = 'prefetched SMEM operand 0']
  %s0 = inlined_call_operand.vmem [shape: f32[12], index: 0, kind: input, shape index: {}]
  %s1 = inlined_call_operand.vmem [shape: f32[2,64,16], index: 1, kind: input, shape index: {}]
  %s2 = inlined_call_operand.hbm [shape: f32[2,4,256], index: 2, kind: output, shape index: {}]
  %s3 = sld [smem:[#allocation0]]
  $region37: #{tpu_custom_call.1} parent=0
    _
  %s5 = ssub.s32 1, %s3
  %s6 = scalar_select 0, %s5, %s3
  %s7 = sshll.u32 %s0, 4
  %s8 = int_to_ptr.vmem [resolvable:$true] %s7
  %10 = dma.vmem_to_smem %s8, 16, [#allocation3], [#allocation2]
  %11 = dma.done [#allocation2], 16
  %12 = sfence
  $region1: #{tpu_custom_call.1} parent=0
    #allocation4 [shape = 'u8[4096]{0}', space=vmem, size = 0x1000, scoped, tag = 'output window, operand 0']
    #allocation5 [shape = 's32[2]{0}', space=sflag, size = 0x8, scoped, tag = 'scoped memory for tpu_custom_call.1']
    %13 = vsyncpa [#allocation5], 0
    %s14 = scalar_lea.sflag [#allocation5], 1
    %15 = vsyncpa %s14, 0
    loop: start=0, step=1, limit=6
    $region2: #{tpu_custom_call.1} parent=1 // loop_pre_header
      _
    $region3: #{tpu_custom_call.1} parent=1 // loop_header
      %s17 = sphi 0, %s21
      %p18 = scmp.ge.s32.totalorder %s17, 6
      %s24 = sphi 0, %s36
      %s25 = sphi 0, %s32
      %s26 = sphi 0, %s24
      %s27 = sphi 0, %s25
      %s28 = sphi 0, %s26
      %s29 = sphi 0, %s27
      %s39 = sphi 0, %s41
      %s42 = sphi 0, %s39
      %s43 = sphi 0, %s42
      %s59 = sphi 0, %s43
      %s67 = sphi 0, %s69
      %s70 = sphi 0, %s67
      %s71 = sphi 0, %s70
      %s87 = sphi 0, %s71
    $region4: #{tpu_custom_call.1} parent=1 // loop_header_branch
      %20 = sbr.rel (%p18) target = $region8
    $region5: #{tpu_custom_call.1} parent=1 // loop_body
      %s22 = ssub.s32 %s17, 1
      %s23 = ssub.s32 %s17, 2
      %s30 = sadd.s32 1, %s25
      %p31 = scmp.ge.s32.totalorder %s30, 2
      %s32 = scalar_select %p31, 0, %s30
      %s33 = sadd.s32 1, %s24
      %s34 = scalar_select %p31, %s33, %s24
      %p35 = scmp.ge.s32.totalorder %s34, 2
      %s36 = scalar_select %p35, 0, %s34
      %s37 = ssub.s32 %s24, %s36
      %p38 = scmp.eq.s32.totalorder %s37, 0
      %s40 = sadd.s32 %s39, 1
      %s41 = scalar_select %p38, %s39, %s40
      %p44 = pneg %p38
      %p45 = scmp.eq.s32.totalorder %s17, 3
      %p46 = por %p44, %p45
      %p47 = scmp.ne.s32.totalorder %s39, %s42
      %p48 = scmp.eq.s32.totalorder %s17, 0
      %p49 = por %p47, %p48
      %p50 = scmp.ne.s32.totalorder %s39, %s42
      %p51 = scmp.eq.s32.totalorder %s22, 3
      %p52 = por %p50, %p51
      %p53 = scmp.ne.s32.totalorder %s42, %s43
      %p54 = scmp.eq.s32.totalorder %s22, 0
      %p55 = por %p53, %p54
      %p56 = scmp.ne.s32.totalorder %s42, %s43
      %p57 = scmp.eq.s32.totalorder %s23, 3
      %p58 = por %p56, %p57
      %p60 = scmp.ne.s32.totalorder %s43, %s59
      %p61 = scmp.eq.s32.totalorder %s23, 0
      %p62 = por %p60, %p61
      %s63 = ssub.s32 %s24, %s36
      %s64 = ssub.s32 %s25, %s32
      %s65 = sor.u32 %s63, %s64
      %p66 = scmp.eq.s32.totalorder %s65, 0
      %s68 = sadd.s32 %s67, 1
      %s69 = scalar_select %p66, %s67, %s68
      %p72 = pneg %p66
      %p73 = scmp.eq.s32.totalorder %s17, 3
      %p74 = por %p72, %p73
      %p75 = scmp.ne.s32.totalorder %s67, %s70
      %p76 = scmp.eq.s32.totalorder %s17, 0
      %p77 = por %p75, %p76
      %p78 = scmp.ne.s32.totalorder %s67, %s70
      %p79 = scmp.eq.s32.totalorder %s22, 3
      %p80 = por %p78, %p79
      %p81 = scmp.ne.s32.totalorder %s70, %s71
      %p82 = scmp.eq.s32.totalorder %s22, 0
      %p83 = por %p81, %p82
      %p84 = scmp.ne.s32.totalorder %s70, %s71
      %p85 = scmp.eq.s32.totalorder %s23, 3
      %p86 = por %p84, %p85
      %p88 = scmp.ne.s32.totalorder %s71, %s87
      %p89 = scmp.eq.s32.totalorder %s23, 0
      %p90 = por %p88, %p89
      %p91 = scmp.le.s32.totalorder 1, %s17
      %p92 = scmp.lt.s32.totalorder %s17, 5
      %p93 = pnand %p91, %p92
      %p94 = pneg %p93
      // Predicated region
      $region9: #{tpu_custom_call.1} parent=5 // pred_check
        _
      $region10: #{tpu_custom_call.1} parent=5 // pred_check_branch
        %96 = sbr.rel (%p93) target = $region12
      $region11: #{tpu_custom_call.1} parent=5 // pred_region
        %s97 = ssub.s32 %s17, 1
      $region12: #{tpu_custom_call.1} parent=5 // pred_fallthru
        _
      %p98 = scmp.lt.s32.totalorder %s17, 4
      // Predicated region
      $region13: #{tpu_custom_call.1} parent=5 // pred_check
        %p99 = pneg %p98
      $region14: #{tpu_custom_call.1} parent=5 // pred_check_branch
        %101 = sbr.rel (%p99) target = $region16
      $region15: #{tpu_custom_call.1} parent=5 // pred_region
        // Predicated region
        $region17: #{tpu_custom_call.1} parent=15 // pred_check
          %p102 = pneg %p49
        $region18: #{tpu_custom_call.1} parent=15 // pred_check_branch
          %104 = sbr.rel (%p102) target = $region20
        $region19: #{tpu_custom_call.1} parent=15 // pred_region
          %p105 = scmp.lt.s32.totalorder %s24, 1
          %s106 = scalar_select %p105, %s24, 1
          %s107 = smul.addr %s106, 8
          %s108 = smul.addr %s107, 8
          %s109 = scalar_lea.vmem %s1, %s108
        $region20: #{tpu_custom_call.1} parent=15 // pred_fallthru
          _
      $region16: #{tpu_custom_call.1} parent=5 // pred_fallthru
        _
      %p110 = scmp.le.s32.totalorder 1, %s17
      %p111 = scmp.lt.s32.totalorder %s17, 5
      %p112 = pnand %p110, %p111
      %p113 = pneg %p112
      // Predicated region
      $region21: #{tpu_custom_call.1} parent=5 // pred_check
        _
      $region22: #{tpu_custom_call.1} parent=5 // pred_check_branch
        %115 = sbr.rel (%p112) target = $region24
      $region23: #{tpu_custom_call.1} parent=5 // pred_region
        %s116 = ssub.s32 %s17, 1
        %p117 = scmp.lt.s32.totalorder %s26, 1
        %s118 = scalar_select %p117, %s26, 1
        %s119 = smul.addr %s118, 8
        %s120 = smul.addr %s119, 8
        %s121 = scalar_lea.vmem %s1, %s120
        %p122 = pneg %p55
        %p123 = pneg %p52
        %p124 = pneg %p83
        %p125 = pneg %p80
        %s126 = sand.u32 %s70, 1
        %s127 = scalar_lea.sflag [#allocation5], %s126
        %s128 = sand.u32 %s70, 1
        %s129 = smul.addr %s128, 4
        %s130 = scalar_lea.vmem [#allocation4], %s129
        %p131 = scmp.lt.s32.totalorder %s26, 1
        %s132 = scalar_select %p131, %s26, 1
        %s133 = smul.addr %s132, 8
        %s134 = smul.addr %s133, 8
        %s135 = scalar_lea.vmem %s1, %s134
        %s136 = smul.u32 %s26, 6
        %s137 = sld [smem:[#allocation3 + %s136]]
        %s138 = sadd.s32 %s136, 1
        %s139 = sld [smem:[#allocation3 + %s138]]
        %s140 = sadd.s32 %s136, 2
        %s141 = sld [smem:[#allocation3 + %s140]]
        %s142 = sadd.s32 %s136, 3
        %s143 = sld [smem:[#allocation3 + %s142]]
        %s144 = sadd.s32 %s136, 4
        %s145 = sld [smem:[#allocation3 + %s144]]
        %s146 = sadd.s32 %s136, 5
        %s147 = sld [smem:[#allocation3 + %s146]]
        %s148 = smul.u32 %s27, 128
        %v149 = vlaneseq
        %v150 = vand.u32 %v149, 127
        %v151 = vstv %s148
        %v152 = vadd.s32 %v151, %v150
        %vm153 = vcmp.lt.s32.totalorder %v152, 255
        %v154 = vsel %vm153, %v152, 255
        %v155 = vcvt.s32.f32 %v154
        %v156 = vadd.f32 %v155, 0.5
        %v157 = vmul.f32 %v156, 0.0625
        %v158 = vfloor.f32 %v157
        %v159 = vmul.f32 %v158, 16.0
        %v160 = vsub.f32 %v155, %v159
        %v161 = vmul.f32 %v160, 0.13333334
        %v162 = vsub.f32 %v161, 1.0
        %v163 = vmul.f32 %v158, 0.13333334
        %v164 = vsub.f32 %v163, 1.0
        %v165 = vstv %s137
        %v166 = vmul.f32 %v165, %v162
        %v167 = vstv %s139
        %v168 = vmul.f32 %v167, %v164
        %v169 = vadd.f32 %v166, %v168
        %v170 = vstv %s141
        %v171 = vadd.f32 %v169, %v170
        %v172 = vstv %s143
        %v173 = vmul.f32 %v172, %v162
        %v174 = vstv %s145
        %v175 = vmul.f32 %v174, %v164
        %v176 = vadd.f32 %v173, %v175
        %v177 = vstv %s147
        %v178 = vadd.f32 %v176, %v177
        %v179 = vadd.f32 %v171, 1.0
        %v180 = vmul.f32 %v179, 7.5
        %v181 = vadd.f32 %v178, 1.0
        %v182 = vmul.f32 %v181, 7.5
        %v183 = vfloor.f32 %v180
        %v184 = vsub.f32 %v180, %v183
        %vm185 = vcmp.ge.f32.partialorder %v183, 0.0
        %vm186 = vcmp.le.f32.partialorder %v183, 15.0
        %vm187 = vmand %vm185, %vm186
        %v188 = vsub.f32 1.0, %v184
        %v189 = vsel %vm187, %v188, 0.0
        %vm190 = vcmp.ge.f32.partialorder %v183, -1.0
        %vm191 = vcmp.le.f32.partialorder %v183, 14.0
        %vm192 = vmand %vm190, %vm191
        %v193 = vsel %vm192, %v184, 0.0
        %v194 = vmax.f32 %v183, -1.0
        %v195 = vmin.f32 %v194, 16.0
        %v196 = vcvt.f32.s32.to.zero.pseudo %v195
        %v197 = vlaneseq
        %v198 = vshrl.u32 %v197, 7
        %v199 = vadd.s32 %v198, 8
        %vm200 = vcmp.eq.s32.totalorder %v198, %v196
        %vm201 = vcmp.eq.s32.totalorder %v199, %v196
        %v202 = vsel %vm200, %v189, 0.0
        %v203 = vsel %vm201, %v189, 0.0
        %v204 = vadd.s32 %v196, 1
        %vm205 = vcmp.eq.s32.totalorder %v198, %v204
        %vm206 = vcmp.eq.s32.totalorder %v199, %v204
        %v207 = vsel %vm205, %v193, 0.0
        %v208 = vsel %vm206, %v193, 0.0
        %v209 = vadd.f32 %v202, %v207
        %v210 = vadd.f32 %v203, %v208
        %v211 = vfloor.f32 %v182
        %v212 = vsub.f32 %v182, %v211
        %vm213 = vcmp.ge.f32.partialorder %v211, 0.0
        %vm214 = vcmp.le.f32.partialorder %v211, 15.0
        %vm215 = vmand %vm213, %vm214
        %v216 = vsub.f32 1.0, %v212
        %v217 = vsel %vm215, %v216, 0.0
        %vm218 = vcmp.ge.f32.partialorder %v211, -1.0
        %vm219 = vcmp.le.f32.partialorder %v211, 14.0
        %vm220 = vmand %vm218, %vm219
        %v221 = vsel %vm220, %v212, 0.0
        %v222 = vmax.f32 %v211, -1.0
        %v223 = vmin.f32 %v222, 16.0
        %v224 = vcvt.f32.s32.to.zero.pseudo %v223
        %vm225 = vcmp.eq.s32.totalorder %v198, %v224
        %vm226 = vcmp.eq.s32.totalorder %v199, %v224
        %v227 = vsel %vm225, %v217, 0.0
        %v228 = vsel %vm226, %v217, 0.0
        %v229 = vadd.s32 %v224, 1
        %vm230 = vcmp.eq.s32.totalorder %v198, %v229
        %vm231 = vcmp.eq.s32.totalorder %v199, %v229
        %v232 = vsel %vm230, %v221, 0.0
        %v233 = vsel %vm231, %v221, 0.0
        %v234 = vadd.f32 %v227, %v232
        %v235 = vadd.f32 %v228, %v233
        %v236 = vld [vmem:[%s135] sm:$0xff]
        %v237 = vld [vmem:[%s135 + $0x8] sm:$0xff]
        %v238 = vld [vmem:[%s135 + $0x10] sm:$0xff]
        %v239 = vld [vmem:[%s135 + $0x18] sm:$0xff]
        %v240 = vld [vmem:[%s135 + $0x20] sm:$0xff]
        %v241 = vld [vmem:[%s135 + $0x28] sm:$0xff]
        %v242 = vld [vmem:[%s135 + $0x30] sm:$0xff]
        %v243 = vld [vmem:[%s135 + $0x38] sm:$0xff]
        %vm244 = vcmask 130048
        %v246 = vsel %vm244, %v236, 0
        %v249 = vsel %vm244, %v237, 0
        %v252 = vsel %vm244, %v238, 0
        %v255 = vsel %vm244, %v239, 0
        %v258 = vsel %vm244, %v240, 0
        %v261 = vsel %vm244, %v241, 0
        %v264 = vsel %vm244, %v242, 0
        %v267 = vsel %vm244, %v243, 0
        %269 = vmatprep.subr.mxu0 0.0
        %270 = vmatpush1.msra.mxu0 %v209
        %271 = vmatprep.subr.mxu0 0.0
        %272 = vmatpush1.msra.mxu0 %v210
        %273 = vmatprep.subr.mxu0 0.0
        %274 = vmatpush1.msra.mxu0 0.0
        %275 = vmatprep.subr.mxu0 0.0
        %276 = vmatpush1.msra.mxu0 0.0
        %277 = vmatprep.subr.mxu0 0.0
        %278 = vmatpush1.msra.mxu0 0.0
        %279 = vmatprep.subr.mxu0 0.0
        %280 = vmatpush1.msra.mxu0 0.0
        %281 = vmatprep.subr.mxu0 0.0
        %282 = vmatpush1.msra.mxu0 0.0
        %283 = vmatprep.subr.mxu0 0.0
        %284 = vmatpush1.msra.mxu0 0.0
        %285 = vmatprep.subr.mxu0 0.0
        %286 = vmatpush1.msra.mxu0 0.0
        %287 = vmatprep.subr.mxu0 0.0
        %288 = vmatpush1.msra.mxu0 0.0
        %289 = vmatprep.subr.mxu0 0.0
        %290 = vmatpush1.msra.mxu0 0.0
        %291 = vmatprep.subr.mxu0 0.0
        %292 = vmatpush1.msra.mxu0 0.0
        %293 = vmatprep.subr.mxu0 0.0
        %294 = vmatpush1.msra.mxu0 0.0
        %295 = vmatprep.subr.mxu0 0.0
        %296 = vmatpush1.msra.mxu0 0.0
        %297 = vmatprep.subr.mxu0 0.0
        %298 = vmatpush1.msra.mxu0 0.0
        %299 = vmatprep.subr.mxu0 0.0
        %300 = vmatpush1.msra.mxu0 0.0
        %301 = vmatprep.subr.mxu0 0.0
        %302 = vmatpush1.msra.mxu0 0.0
        %303 = vmatprep.subr.mxu0 0.0
        %304 = vmatpush1.msra.mxu0 0.0
        %305 = vmatprep.subr.mxu0 0.0
        %306 = vmatpush1.msra.mxu0 0.0
        %307 = vmatprep.subr.mxu0 0.0
        %308 = vmatpush1.msra.mxu0 0.0
        %309 = vmatprep.subr.mxu0 0.0
        %310 = vmatpush1.msra.mxu0 0.0
        %311 = vmatprep.subr.mxu0 0.0
        %312 = vmatpush1.msra.mxu0 0.0
        %313 = vmatprep.subr.mxu0 0.0
        %314 = vmatpush1.msra.mxu0 0.0
        %315 = vmatprep.subr.mxu0 0.0
        %316 = vmatpush1.msra.mxu0 0.0
        %317 = vmatprep.subr.mxu0 0.0
        %318 = vmatpush1.msra.mxu0 0.0
        %319 = vmatprep.subr.mxu0 0.0
        %320 = vmatpush1.msra.mxu0 0.0
        %321 = vmatprep.subr.mxu0 0.0
        %322 = vmatpush1.msra.mxu0 0.0
        %323 = vmatprep.subr.mxu0 0.0
        %324 = vmatpush1.msra.mxu0 0.0
        %325 = vmatprep.subr.mxu0 0.0
        %326 = vmatpush1.msra.mxu0 0.0
        %327 = vmatprep.subr.mxu0 0.0
        %328 = vmatpush1.msra.mxu0 0.0
        %329 = vmatprep.subr.mxu0 0.0
        %330 = vmatpush1.msra.mxu0 0.0
        %331 = vmatprep.subr.mxu0 0.0
        %332 = vmatpush1.msra.mxu0 0.0
        %333 = vmatprep.mubr.f32.mxu0 0.0
        %334 = vmatmul.mubr.f32.gmra.mrb[0].mxu0 %v246
        %v335 = vpop.f32.mrb[0].mxu0
        %v336 = vadd.f32 0.0, %v335
        %v337 = vpop.f32.mrb[0].mxu0
        %338 = vmatprep.mubr.f32.mxu0 0.0
        %339 = vmatmul.mubr.f32.gmra.mrb[0].mxu0 %v249
        %v340 = vpop.f32.mrb[0].mxu0
        %v341 = vadd.f32 0.0, %v340
        %v342 = vpop.f32.mrb[0].mxu0
        %343 = vmatprep.mubr.f32.mxu0 0.0
        %344 = vmatmul.mubr.f32.gmra.mrb[0].mxu0 %v252
        %v345 = vpop.f32.mrb[0].mxu0
        %v346 = vadd.f32 0.0, %v345
        %v347 = vpop.f32.mrb[0].mxu0
        %348 = vmatprep.mubr.f32.mxu0 0.0
        %349 = vmatmul.mubr.f32.gmra.mrb[0].mxu0 %v255
        %v350 = vpop.f32.mrb[0].mxu0
        %v351 = vadd.f32 0.0, %v350
        %v352 = vpop.f32.mrb[0].mxu0
        %353 = vmatprep.mubr.f32.mxu0 0.0
        %354 = vmatmul.mubr.f32.gmra.mrb[0].mxu0 %v258
        %v355 = vpop.f32.mrb[0].mxu0
        %v356 = vadd.f32 0.0, %v355
        %v357 = vpop.f32.mrb[0].mxu0
        %358 = vmatprep.mubr.f32.mxu0 0.0
        %359 = vmatmul.mubr.f32.gmra.mrb[0].mxu0 %v261
        %v360 = vpop.f32.mrb[0].mxu0
        %v361 = vadd.f32 0.0, %v360
        %v362 = vpop.f32.mrb[0].mxu0
        %363 = vmatprep.mubr.f32.mxu0 0.0
        %364 = vmatmul.mubr.f32.gmra.mrb[0].mxu0 %v264
        %v365 = vpop.f32.mrb[0].mxu0
        %v366 = vadd.f32 0.0, %v365
        %v367 = vpop.f32.mrb[0].mxu0
        %368 = vmatprep.mubr.f32.mxu0 0.0
        %369 = vmatmul.mubr.f32.gmra.mrb[0].mxu0 %v267
        %v370 = vpop.f32.mrb[0].mxu0
        %v371 = vadd.f32 0.0, %v370
        %v372 = vpop.f32.mrb[0].mxu0
        %373 = vdwg.mxu0
        %v374 = vmul.f32 %v336, %v234
        %v375 = vmul.f32 %v341, %v235
        %v376 = vadd.f32 %v374, %v375
        %v377 = vrot.slane %v376, 4
        %v378 = vadd.f32 %v376, %v377
        %v379 = vrot.slane %v378, 2
        %v380 = vadd.f32 %v378, %v379
        %v381 = vrot.slane %v380, 1
        %v382 = vadd.f32 %v380, %v381
        %v383 = vmul.f32 %v346, %v234
        %v384 = vmul.f32 %v351, %v235
        %v385 = vadd.f32 %v383, %v384
        %v386 = vrot.slane %v385, 4
        %v387 = vadd.f32 %v385, %v386
        %v388 = vrot.slane %v387, 2
        %v389 = vadd.f32 %v387, %v388
        %v390 = vrot.slane %v389, 1
        %v391 = vadd.f32 %v389, %v390
        %v392 = vmul.f32 %v356, %v234
        %v393 = vmul.f32 %v361, %v235
        %v394 = vadd.f32 %v392, %v393
        %v395 = vrot.slane %v394, 4
        %v396 = vadd.f32 %v394, %v395
        %v397 = vrot.slane %v396, 2
        %v398 = vadd.f32 %v396, %v397
        %v399 = vrot.slane %v398, 1
        %v400 = vadd.f32 %v398, %v399
        %v401 = vmul.f32 %v366, %v234
        %v402 = vmul.f32 %v371, %v235
        %v403 = vadd.f32 %v401, %v402
        %v404 = vrot.slane %v403, 4
        %v405 = vadd.f32 %v403, %v404
        %v406 = vrot.slane %v405, 2
        %v407 = vadd.f32 %v405, %v406
        %v408 = vrot.slane %v407, 1
        %v409 = vadd.f32 %v407, %v408
        %vm410 = vcmask 1040384
        %v411 = vsel %vm410, %v382, %v391
        %vm412 = vcmask 1041408
        %v413 = vsel %vm412, %v411, %v400
        %vm414 = vcmask 1042432
        %v415 = vsel %vm414, %v413, %v409
        %416 = vst [vmem:[%s130] sm:$0xf] %v415
        %s417 = sand.u32 %s70, 1
        %s418 = scalar_lea.sflag [#allocation5], %s417
        %s419 = sand.u32 %s70, 1
        %s420 = smul.addr %s419, 4
        %s421 = scalar_lea.vmem [#allocation4], %s420
        // Predicated region
        $region25: #{tpu_custom_call.1} parent=23 // pred_check
          %p422 = pneg %p80
        $region26: #{tpu_custom_call.1} parent=23 // pred_check_branch
          %424 = sbr.rel (%p422) target = $region28
        $region27: #{tpu_custom_call.1} parent=23 // pred_region
          %s426 = ssub.s32 64, 64
          %427 = vsyncadd %s418, %s426
          %s428 = smul.addr %s26, 2
          %s429 = sadd.s32 %s27, %s428
          %s430 = smul.addr %s429, 64
          %s431 = scalar_lea.hbm %s2, %s430
          %s433 = sshll.u32 %s421, 4
          %s434 = int_to_ptr.vmem [resolvable:$true] %s433
          %436 = dma.vmem_to_hbm [thread:$0]  %s434, 64, %s431, %s418
        $region28: #{tpu_custom_call.1} parent=23 // pred_fallthru
          _
      $region24: #{tpu_custom_call.1} parent=5 // pred_fallthru
        _
      %p437 = scmp.le.s32.totalorder 2, %s17
      // Predicated region
      $region29: #{tpu_custom_call.1} parent=5 // pred_check
        %p438 = pneg %p437
      $region30: #{tpu_custom_call.1} parent=5 // pred_check_branch
        %440 = sbr.rel (%p438) target = $region32
      $region31: #{tpu_custom_call.1} parent=5 // pred_region
        %s441 = ssub.s32 %s17, 2
        // Predicated region
        $region33: #{tpu_custom_call.1} parent=31 // pred_check
          %p442 = pneg %p86
        $region34: #{tpu_custom_call.1} parent=31 // pred_check_branch
          %444 = sbr.rel (%p442) target = $region36
        $region35: #{tpu_custom_call.1} parent=31 // pred_region
          %s445 = sand.u32 %s71, 1
          %s446 = scalar_lea.sflag [#allocation5], %s445
          %s447 = sand.u32 %s71, 1
          %s448 = smul.addr %s447, 4
          %s449 = scalar_lea.vmem [#allocation4], %s448
          %450 = dma.done %s446, 64
        $region36: #{tpu_custom_call.1} parent=31 // pred_fallthru
          _
      $region32: #{tpu_custom_call.1} parent=5 // pred_fallthru
        _
    $region6: #{tpu_custom_call.1} parent=1 // loop_footer
      %s21 = sadd.s32 1, %s17
    $region7: #{tpu_custom_call.1} parent=1 // loop_footer_branch
      %16 = sbr.rel target = $region3
    $region8: #{tpu_custom_call.1} parent=1 // loop_exit
      _
    %451 = vsyncpa [#allocation5], 1
    %s452 = scalar_lea.sflag [#allocation5], 1
    %453 = vsyncpa %s452, 1

</llo_original>
